<compile_context>
chip_gen: v7x
topology: tpu7x:2x2x1
jax: 0.10.0
libtpu: 0.0.40
codegen_flags: <defaults>
</compile_context>

<pallas_src>
import math

import jax
import jax.numpy as jnp
from jax.experimental import pallas as pl
from jax.experimental.pallas import tpu as pltpu

# ----------------------------- model config ---------------------------------
B = 2          # batch
S = 8          # context length (seq)
D = 32         # transformer width
H = 4          # attention heads
DH = D // H    # head dim
LAYERS = 2     # transformer depth
VOCAB = 64     # vocab size
E = 16         # output embed dim (text_projection cols)
LN_EPS = 1e-5


def _layer_norm(x, g, b):
    mean = jnp.mean(x, axis=-1, keepdims=True)
    var = jnp.mean((x - mean) ** 2, axis=-1, keepdims=True)
    return (x - mean) * jax.lax.rsqrt(var + LN_EPS) * g + b


# --------------------------- fused encoder kernel ----------------------------
def encoder_kernel(eot_ref,                                   # (B,) int32, SMEM (scalar prefetch)
                   x_ref,                                     # (1, S, D)
                   ln1g_ref, ln1b_ref, wqkv_ref, bqkv_ref,    # per-layer blocks
                   wo_ref, bo_ref, ln2g_ref, ln2b_ref,
                   wfc_ref, bfc_ref, wproj_ref, bproj_ref,
                   lnf_g_ref, lnf_b_ref, proj_ref,            # final LN + projection
                   out_ref,                                   # (1, 1, E)
                   x_sc):                                     # VMEM carry (S, D)
    b = pl.program_id(0)
    l = pl.program_id(1)

    # Load this batch element's activations into the carried scratch at layer 0.
    @pl.when(l == 0)
    def _():
        x_sc[...] = x_ref[0]

    x = x_sc[...]                                             # (S, D)

    # ---- attention branch: LN1 -> causal MHA -> residual ----
    h = _layer_norm(x, ln1g_ref[0], ln1b_ref[0])
    qkv = jnp.dot(h, wqkv_ref[0], preferred_element_type=jnp.float32) + bqkv_ref[0]
    # (1/sqrt(DH) attention scale is folded into the q columns of w_qkv/b_qkv at init)
    qh = jnp.stack([qkv[:, i * DH:(i + 1) * DH] for i in range(H)], axis=0)          # (H,S,DH)
    kh = jnp.stack([qkv[:, D + i * DH:D + (i + 1) * DH] for i in range(H)], axis=0)
    vh = jnp.stack([qkv[:, 2 * D + i * DH:2 * D + (i + 1) * DH] for i in range(H)], axis=0)

    # Causal additive mask generated in-kernel (0 on/below diag, -1e9 above).
    row = jax.lax.broadcasted_iota(jnp.int32, (S, S), 0)
    col = jax.lax.broadcasted_iota(jnp.int32, (S, S), 1)
    mask = jnp.where(col <= row, 0.0, -1e9).astype(jnp.float32)

    s = jnp.einsum("hqd,hkd->hqk", qh, kh, preferred_element_type=jnp.float32)
    s = s + mask[None, :, :]
    s = s - jnp.max(s, axis=-1, keepdims=True)
    p = jnp.exp(s)
    p = p * pl.reciprocal(jnp.sum(p, axis=-1, keepdims=True), approx=True)
    o = jnp.einsum("hqk,hkd->hqd", p, vh, preferred_element_type=jnp.float32)
    attn = jnp.concatenate([o[i] for i in range(H)], axis=-1)                         # (S, D)

    attn = jnp.dot(attn, wo_ref[0], preferred_element_type=jnp.float32) + bo_ref[0]
    x1 = x + attn

    # ---- MLP branch: LN2 -> QuickGELU MLP -> residual ----
    h2 = _layer_norm(x1, ln2g_ref[0], ln2b_ref[0])
    fc = jnp.dot(h2, wfc_ref[0], preferred_element_type=jnp.float32) + bfc_ref[0]
    fc = fc * jax.nn.sigmoid(1.702 * fc)                      # QuickGELU (CLIP)
    mlp = jnp.dot(fc, wproj_ref[0], preferred_element_type=jnp.float32) + bproj_ref[0]
    xn = x1 + mlp

    x_sc[...] = xn                                            # carry to the next layer

    # ---- fused epilogue at the last layer: EOT gather -> ln_final -> projection ----
    @pl.when(l == pl.num_programs(1) - 1)
    def _():
        e = eot_ref[b]
        sel = (jax.lax.broadcasted_iota(jnp.int32, (S, 1), 0) == e).astype(jnp.float32)
        xe = jnp.sum(xn * sel, axis=0, keepdims=True)         # (1, D) EOT row
        xe = _layer_norm(xe, lnf_g_ref[...], lnf_b_ref[...])
        out_ref[0] = jnp.dot(xe, proj_ref[...],
                             preferred_element_type=jnp.float32).astype(out_ref.dtype)


# ------------------------------ pallas wrapper --------------------------------
def _per_layer(shape):
    # Stacked per-layer parameter (leading L axis): pick layer `l` each grid step.
    return pl.BlockSpec((1,) + shape, lambda b, l, eot: (l,) + (0,) * len(shape))


def _shared(shape):
    # Parameter shared across all grid steps (resident in VMEM).
    return pl.BlockSpec(shape, lambda b, l, eot: (0,) * len(shape))


@jax.jit
def text_encoder_forward(text, params):
    # token embedding gather + positional embedding (plain-JAX glue)
    x = jnp.take(params["token_embedding"], text, axis=0)     # (B, S, D)
    x = x + params["positional_embedding"][None, :, :]
    eot = jnp.argmax(text, axis=-1).astype(jnp.int32)         # (B,) EOT positions

    in_specs = [
        pl.BlockSpec((1, S, D), lambda b, l, eot_r: (b, 0, 0)),   # x
        _per_layer((1, D)),                                       # ln1_g
        _per_layer((1, D)),                                       # ln1_b
        _per_layer((D, 3 * D)),                                   # w_qkv
        _per_layer((1, 3 * D)),                                   # b_qkv
        _per_layer((D, D)),                                       # w_o
        _per_layer((1, D)),                                       # b_o
        _per_layer((1, D)),                                       # ln2_g
        _per_layer((1, D)),                                       # ln2_b
        _per_layer((D, 4 * D)),                                   # w_fc
        _per_layer((1, 4 * D)),                                   # b_fc
        _per_layer((4 * D, D)),                                   # w_proj
        _per_layer((1, D)),                                       # b_proj
        _shared((1, D)),                                          # ln_final_g
        _shared((1, D)),                                          # ln_final_b
        _shared((D, E)),                                          # text_projection
    ]

    out = pl.pallas_call(
        encoder_kernel,
        out_shape=jax.ShapeDtypeStruct((B, 1, E), jnp.float32),
        grid_spec=pltpu.PrefetchScalarGridSpec(
            num_scalar_prefetch=1,
            grid=(B, LAYERS),
            in_specs=in_specs,
            out_specs=pl.BlockSpec((1, 1, E), lambda b, l, eot_r: (b, 0, 0)),
            scratch_shapes=[pltpu.VMEM((S, D), jnp.float32)],
        ),
        compiler_params=pltpu.CompilerParams(
            dimension_semantics=("parallel", "arbitrary")),
    )(eot, x,
      params["ln1_g"], params["ln1_b"], params["w_qkv"], params["b_qkv"],
      params["w_o"], params["b_o"], params["ln2_g"], params["ln2_b"],
      params["w_fc"], params["b_fc"], params["w_proj"], params["b_proj"],
      params["ln_final_g"], params["ln_final_b"], params["text_projection"])
    return out.reshape(B, E)


# ------------------------------ parameter init --------------------------------
def init_params(key):
    keys = jax.random.split(key, 8)
    scale = 0.02

    def nrm(k, shape):
        return (scale * jax.random.normal(k, shape)).astype(jnp.float32)

    # Weights stored pre-transposed to (in, out) for `x @ W` in-kernel, stacked
    # along a leading LAYERS axis so the kernel can stream layer `l` per grid step.
    w_qkv = nrm(keys[2], (LAYERS, D, 3 * D))
    b_qkv = jnp.zeros((LAYERS, 1, 3 * D), jnp.float32)
    # Fold the 1/sqrt(head_dim) attention scale into the q columns (load-time transform).
    qscale = 1.0 / math.sqrt(DH)
    w_qkv = w_qkv.at[:, :, :D].multiply(qscale)
    b_qkv = b_qkv.at[:, :, :D].multiply(qscale)

    params = {
        "token_embedding": nrm(keys[0], (VOCAB, D)),
        "positional_embedding": nrm(keys[1], (S, D)),
        "ln1_g": jnp.ones((LAYERS, 1, D), jnp.float32),
        "ln1_b": jnp.zeros((LAYERS, 1, D), jnp.float32),
        "w_qkv": w_qkv,
        "b_qkv": b_qkv,
        "w_o": nrm(keys[3], (LAYERS, D, D)),
        "b_o": jnp.zeros((LAYERS, 1, D), jnp.float32),
        "ln2_g": jnp.ones((LAYERS, 1, D), jnp.float32),
        "ln2_b": jnp.zeros((LAYERS, 1, D), jnp.float32),
        "w_fc": nrm(keys[4], (LAYERS, D, 4 * D)),
        "b_fc": jnp.zeros((LAYERS, 1, 4 * D), jnp.float32),
        "w_proj": nrm(keys[5], (LAYERS, 4 * D, D)),
        "b_proj": jnp.zeros((LAYERS, 1, D), jnp.float32),
        "ln_final_g": jnp.ones((1, D), jnp.float32),
        "ln_final_b": jnp.zeros((1, D), jnp.float32),
        "text_projection": nrm(keys[6], (D, E)),
    }
    return params


if __name__ == "__main__":
    key = jax.random.PRNGKey(0)
    pkey, tkey = jax.random.split(key)
    params = init_params(pkey)
    text = jax.random.randint(tkey, (B, S), minval=0, maxval=VOCAB, dtype=jnp.int32)
    out = text_encoder_forward(text, params)
    jax.block_until_ready(out)
    assert out.shape == (B, E) and out.dtype == jnp.float32
    assert bool(jnp.all(jnp.isfinite(out)))
    print("KERNEL_OK")
</pallas_src>

<mosaic_0001>
module attributes {stable_mosaic.version = 11 : i64} {
  func.func @encoder_kernel(%arg0: i32, %arg1: i32, %arg2: memref<2xi32, #tpu.memory_space<smem>>, %arg3: memref<1x8x32xf32, #tpu.memory_space<vmem>>, %arg4: memref<1x1x32xf32, #tpu.memory_space<vmem>>, %arg5: memref<1x1x32xf32, #tpu.memory_space<vmem>>, %arg6: memref<1x32x96xf32, #tpu.memory_space<vmem>>, %arg7: memref<1x1x96xf32, #tpu.memory_space<vmem>>, %arg8: memref<1x32x32xf32, #tpu.memory_space<vmem>>, %arg9: memref<1x1x32xf32, #tpu.memory_space<vmem>>, %arg10: memref<1x1x32xf32, #tpu.memory_space<vmem>>, %arg11: memref<1x1x32xf32, #tpu.memory_space<vmem>>, %arg12: memref<1x32x128xf32, #tpu.memory_space<vmem>>, %arg13: memref<1x1x128xf32, #tpu.memory_space<vmem>>, %arg14: memref<1x128x32xf32, #tpu.memory_space<vmem>>, %arg15: memref<1x1x32xf32, #tpu.memory_space<vmem>>, %arg16: memref<1x32xf32, #tpu.memory_space<vmem>>, %arg17: memref<1x32xf32, #tpu.memory_space<vmem>>, %arg18: memref<32x16xf32, #tpu.memory_space<vmem>>, %arg19: memref<1x1x16xf32, #tpu.memory_space<vmem>>, %arg20: memref<8x32xf32, #tpu.memory_space<vmem>>) attributes {dimension_semantics = [#tpu.dimension_semantics<parallel>, #tpu.dimension_semantics<arbitrary>], iteration_bounds = array<i64: 2, 2>, scalar_prefetch = 1 : i64, scratch_operands = 1 : i64, tpu.core_type = #tpu.core_type<tc>, window_params = [{transform_indices = @transform_0, window_bounds = array<i64: 1, 8, 32>}, {transform_indices = @transform_1, window_bounds = array<i64: 1, 1, 32>}, {transform_indices = @transform_2, window_bounds = array<i64: 1, 1, 32>}, {transform_indices = @transform_3, window_bounds = array<i64: 1, 32, 96>}, {transform_indices = @transform_4, window_bounds = array<i64: 1, 1, 96>}, {transform_indices = @transform_5, window_bounds = array<i64: 1, 32, 32>}, {transform_indices = @transform_6, window_bounds = array<i64: 1, 1, 32>}, {transform_indices = @transform_7, window_bounds = array<i64: 1, 1, 32>}, {transform_indices = @transform_8, window_bounds = array<i64: 1, 1, 32>}, {transform_indices = @transform_9, window_bounds = array<i64: 1, 32, 128>}, {transform_indices = @transform_10, window_bounds = array<i64: 1, 1, 128>}, {transform_indices = @transform_11, window_bounds = array<i64: 1, 128, 32>}, {transform_indices = @transform_12, window_bounds = array<i64: 1, 1, 32>}, {pipeline_mode = #tpu.pipeline_mode<synchronous>, transform_indices = @transform_13, window_bounds = array<i64: 1, 32>}, {pipeline_mode = #tpu.pipeline_mode<synchronous>, transform_indices = @transform_14, window_bounds = array<i64: 1, 32>}, {pipeline_mode = #tpu.pipeline_mode<synchronous>, transform_indices = @transform_15, window_bounds = array<i64: 32, 16>}, {transform_indices = @transform_16, window_bounds = array<i64: 1, 1, 16>}]} {
    %c0_i32 = arith.constant 0 : i32
    %0 = arith.cmpi eq, %arg1, %c0_i32 : i32
    %1 = arith.extui %0 : i1 to i32
    %c0_i32_0 = arith.constant 0 : i32
    %2 = arith.cmpi ne, %1, %c0_i32_0 : i32
    scf.if %2 {
      %c0_62 = arith.constant 0 : index
      %c0_63 = arith.constant 0 : index
      %c0_64 = arith.constant 0 : index
      %155 = vector.load %arg3[%c0_62, %c0_63, %c0_64] : memref<1x8x32xf32, #tpu.memory_space<vmem>>, vector<1x8x32xf32>
      %156 = vector.shape_cast %155 : vector<1x8x32xf32> to vector<8x32xf32>
      %c0_65 = arith.constant 0 : index
      %c0_66 = arith.constant 0 : index
      %157 = vector.load %arg20[%c0_65, %c0_66] : memref<8x32xf32, #tpu.memory_space<vmem>>, vector<8x32xf32>
      tpu.vector_store %arg20[%c0_65, %c0_66], %156 {strides = array<i32>} : memref<8x32xf32, #tpu.memory_space<vmem>>, vector<8x32xf32>,
    } else {
    }
    %c0 = arith.constant 0 : index
    %c0_1 = arith.constant 0 : index
    %3 = vector.load %arg20[%c0, %c0_1] : memref<8x32xf32, #tpu.memory_space<vmem>>, vector<8x32xf32>
    %c0_2 = arith.constant 0 : index
    %c0_3 = arith.constant 0 : index
    %c0_4 = arith.constant 0 : index
    %4 = vector.load %arg4[%c0_2, %c0_3, %c0_4] : memref<1x1x32xf32, #tpu.memory_space<vmem>>, vector<1x1x32xf32>
    %5 = vector.shape_cast %4 : vector<1x1x32xf32> to vector<1x32xf32>
    %c0_5 = arith.constant 0 : index
    %c0_6 = arith.constant 0 : index
    %c0_7 = arith.constant 0 : index
    %6 = vector.load %arg5[%c0_5, %c0_6, %c0_7] : memref<1x1x32xf32, #tpu.memory_space<vmem>>, vector<1x1x32xf32>
    %7 = vector.shape_cast %6 : vector<1x1x32xf32> to vector<1x32xf32>
    %cst = arith.constant dense<0.000000e+00> : vector<8xf32>
    %8 = vector.multi_reduction <add>, %3, %cst [1] : vector<8x32xf32> to vector<8xf32>
    %9 = vector.shape_cast %8 : vector<8xf32> to vector<8x1xf32>
    %cst_8 = arith.constant 3.200000e+01 : f32
    %10 = vector.broadcast %cst_8 : f32 to vector<8x1xf32>
    %11 = arith.divf %9, %10 : vector<8x1xf32>
    %12 = vector.broadcast %11 : vector<8x1xf32> to vector<8x32xf32>
    %13 = arith.subf %3, %12 : vector<8x32xf32>
    %14 = arith.mulf %13, %13 : vector<8x32xf32>
    %cst_9 = arith.constant dense<0.000000e+00> : vector<8xf32>
    %15 = vector.multi_reduction <add>, %14, %cst_9 [1] : vector<8x32xf32> to vector<8xf32>
    %16 = vector.shape_cast %15 : vector<8xf32> to vector<8x1xf32>
    %cst_10 = arith.constant 3.200000e+01 : f32
    %17 = vector.broadcast %cst_10 : f32 to vector<8x1xf32>
    %18 = arith.divf %16, %17 : vector<8x1xf32>
    %19 = vector.broadcast %11 : vector<8x1xf32> to vector<8x32xf32>
    %20 = arith.subf %3, %19 : vector<8x32xf32>
    %cst_11 = arith.constant 9.99999974E-6 : f32
    %21 = vector.broadcast %cst_11 : f32 to vector<8x1xf32>
    %22 = arith.addf %18, %21 : vector<8x1xf32>
    %23 = math.rsqrt %22 : vector<8x1xf32>
    %24 = vector.broadcast %23 : vector<8x1xf32> to vector<8x32xf32>
    %25 = arith.mulf %20, %24 : vector<8x32xf32>
    %26 = vector.broadcast %5 : vector<1x32xf32> to vector<8x32xf32>
    %27 = arith.mulf %25, %26 : vector<8x32xf32>
    %28 = vector.broadcast %7 : vector<1x32xf32> to vector<8x32xf32>
    %29 = arith.addf %27, %28 : vector<8x32xf32>
    %c0_12 = arith.constant 0 : index
    %c0_13 = arith.constant 0 : index
    %c0_14 = arith.constant 0 : index
    %30 = vector.load %arg6[%c0_12, %c0_13, %c0_14] : memref<1x32x96xf32, #tpu.memory_space<vmem>>, vector<1x32x96xf32>
    %31 = vector.shape_cast %30 : vector<1x32x96xf32> to vector<32x96xf32>
    %cst_15 = arith.constant dense<0.000000e+00> : vector<8x96xf32>
    %32 = tpu.matmul %29, %31, %cst_15 {dimension_numbers = #tpu.dot_dimension_numbers<[1], [0], [0], [1], [0, 0, 1, 1], [], []>} : vector<8x32xf32>, vector<32x96xf32>, vector<8x96xf32> -> vector<8x96xf32>
    %c0_16 = arith.constant 0 : index
    %c0_17 = arith.constant 0 : index
    %c0_18 = arith.constant 0 : index
    %33 = vector.load %arg7[%c0_16, %c0_17, %c0_18] : memref<1x1x96xf32, #tpu.memory_space<vmem>>, vector<1x1x96xf32>
    %34 = vector.shape_cast %33 : vector<1x1x96xf32> to vector<1x96xf32>
    %35 = vector.broadcast %34 : vector<1x96xf32> to vector<8x96xf32>
    %36 = arith.addf %32, %35 : vector<8x96xf32>
    %37 = vector.extract_strided_slice %36 {offsets = [0, 0], sizes = [8, 8], strides = [1, 1]} : vector<8x96xf32> to vector<8x8xf32>
    %38 = vector.extract_strided_slice %36 {offsets = [0, 8], sizes = [8, 8], strides = [1, 1]} : vector<8x96xf32> to vector<8x8xf32>
    %39 = vector.extract_strided_slice %36 {offsets = [0, 16], sizes = [8, 8], strides = [1, 1]} : vector<8x96xf32> to vector<8x8xf32>
    %40 = vector.extract_strided_slice %36 {offsets = [0, 24], sizes = [8, 8], strides = [1, 1]} : vector<8x96xf32> to vector<8x8xf32>
    %41 = vector.shape_cast %37 : vector<8x8xf32> to vector<1x8x8xf32>
    %42 = vector.shape_cast %38 : vector<8x8xf32> to vector<1x8x8xf32>
    %43 = vector.shape_cast %39 : vector<8x8xf32> to vector<1x8x8xf32>
    %44 = vector.shape_cast %40 : vector<8x8xf32> to vector<1x8x8xf32>
    %45 = tpu.concatenate %41, %42, %43, %44 in 0 : vector<1x8x8xf32>, vector<1x8x8xf32>, vector<1x8x8xf32>, vector<1x8x8xf32> -> vector<4x8x8xf32>
    %46 = vector.extract_strided_slice %36 {offsets = [0, 32], sizes = [8, 8], strides = [1, 1]} : vector<8x96xf32> to vector<8x8xf32>
    %47 = vector.extract_strided_slice %36 {offsets = [0, 40], sizes = [8, 8], strides = [1, 1]} : vector<8x96xf32> to vector<8x8xf32>
    %48 = vector.extract_strided_slice %36 {offsets = [0, 48], sizes = [8, 8], strides = [1, 1]} : vector<8x96xf32> to vector<8x8xf32>
    %49 = vector.extract_strided_slice %36 {offsets = [0, 56], sizes = [8, 8], strides = [1, 1]} : vector<8x96xf32> to vector<8x8xf32>
    %50 = vector.shape_cast %46 : vector<8x8xf32> to vector<1x8x8xf32>
    %51 = vector.shape_cast %47 : vector<8x8xf32> to vector<1x8x8xf32>
    %52 = vector.shape_cast %48 : vector<8x8xf32> to vector<1x8x8xf32>
    %53 = vector.shape_cast %49 : vector<8x8xf32> to vector<1x8x8xf32>
    %54 = tpu.concatenate %50, %51, %52, %53 in 0 : vector<1x8x8xf32>, vector<1x8x8xf32>, vector<1x8x8xf32>, vector<1x8x8xf32> -> vector<4x8x8xf32>
    %55 = vector.extract_strided_slice %36 {offsets = [0, 64], sizes = [8, 8], strides = [1, 1]} : vector<8x96xf32> to vector<8x8xf32>
    %56 = vector.extract_strided_slice %36 {offsets = [0, 72], sizes = [8, 8], strides = [1, 1]} : vector<8x96xf32> to vector<8x8xf32>
    %57 = vector.extract_strided_slice %36 {offsets = [0, 80], sizes = [8, 8], strides = [1, 1]} : vector<8x96xf32> to vector<8x8xf32>
    %58 = vector.extract_strided_slice %36 {offsets = [0, 88], sizes = [8, 8], strides = [1, 1]} : vector<8x96xf32> to vector<8x8xf32>
    %59 = vector.shape_cast %55 : vector<8x8xf32> to vector<1x8x8xf32>
    %60 = vector.shape_cast %56 : vector<8x8xf32> to vector<1x8x8xf32>
    %61 = vector.shape_cast %57 : vector<8x8xf32> to vector<1x8x8xf32>
    %62 = vector.shape_cast %58 : vector<8x8xf32> to vector<1x8x8xf32>
    %63 = tpu.concatenate %59, %60, %61, %62 in 0 : vector<1x8x8xf32>, vector<1x8x8xf32>, vector<1x8x8xf32>, vector<1x8x8xf32> -> vector<4x8x8xf32>
    %64 = tpu.iota {dimensions = array<i32: 0>} : vector<8x8xi32>
    %65 = tpu.iota {dimensions = array<i32: 1>} : vector<8x8xi32>
    %66 = arith.cmpi sle, %65, %64 : vector<8x8xi32>
    %cst_19 = arith.constant 0.000000e+00 : f32
    %cst_20 = arith.constant -1.000000e+09 : f32
    %67 = vector.broadcast %cst_19 : f32 to vector<8x8xf32>
    %68 = vector.broadcast %cst_20 : f32 to vector<8x8xf32>
    %69 = arith.select %66, %67, %68 : vector<8x8xi1>, vector<8x8xf32>
    "tpu.trace_start"() <{level = 10 : i32, message = "hqd,hkd->hqk"}> : () -> ()
    %cst_21 = arith.constant dense<0.000000e+00> : vector<4x8x8xf32>
    %70 = tpu.matmul %45, %54, %cst_21 {dimension_numbers = #tpu.dot_dimension_numbers<[2], [2], [1], [1], [0, 0, 0, 1, 1, 1], [0], [0]>} : vector<4x8x8xf32>, vector<4x8x8xf32>, vector<4x8x8xf32> -> vector<4x8x8xf32>
    "tpu.trace_stop"() : () -> ()
    %71 = vector.shape_cast %69 : vector<8x8xf32> to vector<1x8x8xf32>
    %72 = vector.broadcast %71 : vector<1x8x8xf32> to vector<4x8x8xf32>
    %73 = arith.addf %70, %72 : vector<4x8x8xf32>
    %cst_22 = arith.constant dense<0xFF800000> : vector<4x8xf32>
    %74 = vector.multi_reduction <maximumf>, %73, %cst_22 [2] : vector<4x8x8xf32> to vector<4x8xf32>
    %75 = vector.shape_cast %74 : vector<4x8xf32> to vector<4x8x1xf32>
    %76 = vector.broadcast %75 : vector<4x8x1xf32> to vector<4x8x8xf32>
    %77 = arith.subf %73, %76 : vector<4x8x8xf32>
    %78 = math.exp %77 : vector<4x8x8xf32>
    %cst_23 = arith.constant dense<0.000000e+00> : vector<4x8xf32>
    %79 = vector.multi_reduction <add>, %78, %cst_23 [2] : vector<4x8x8xf32> to vector<4x8xf32>
    %80 = vector.shape_cast %79 : vector<4x8xf32> to vector<4x8x1xf32>
    %81 = tpu.reciprocal %80 {approx = true} : vector<4x8x1xf32> -> vector<4x8x1xf32>
    %82 = vector.broadcast %81 : vector<4x8x1xf32> to vector<4x8x8xf32>
    %83 = arith.mulf %78, %82 : vector<4x8x8xf32>
    "tpu.trace_start"() <{level = 10 : i32, message = "hqk,hkd->hqd"}> : () -> ()
    %cst_24 = arith.constant dense<0.000000e+00> : vector<4x8x8xf32>
    %84 = tpu.matmul %83, %63, %cst_24 {dimension_numbers = #tpu.dot_dimension_numbers<[2], [1], [1], [2], [0, 0, 0, 1, 1, 2], [0], [0]>} : vector<4x8x8xf32>, vector<4x8x8xf32>, vector<4x8x8xf32> -> vector<4x8x8xf32>
    "tpu.trace_stop"() : () -> ()
    %85 = vector.extract_strided_slice %84 {offsets = [0, 0, 0], sizes = [1, 8, 8], strides = [1, 1, 1]} : vector<4x8x8xf32> to vector<1x8x8xf32>
    %86 = vector.shape_cast %85 : vector<1x8x8xf32> to vector<8x8xf32>
    %87 = vector.extract_strided_slice %84 {offsets = [1, 0, 0], sizes = [1, 8, 8], strides = [1, 1, 1]} : vector<4x8x8xf32> to vector<1x8x8xf32>
    %88 = vector.shape_cast %87 : vector<1x8x8xf32> to vector<8x8xf32>
    %89 = vector.extract_strided_slice %84 {offsets = [2, 0, 0], sizes = [1, 8, 8], strides = [1, 1, 1]} : vector<4x8x8xf32> to vector<1x8x8xf32>
    %90 = vector.shape_cast %89 : vector<1x8x8xf32> to vector<8x8xf32>
    %91 = vector.extract_strided_slice %84 {offsets = [3, 0, 0], sizes = [1, 8, 8], strides = [1, 1, 1]} : vector<4x8x8xf32> to vector<1x8x8xf32>
    %92 = vector.shape_cast %91 : vector<1x8x8xf32> to vector<8x8xf32>
    %93 = tpu.concatenate %86, %88, %90, %92 in 1 : vector<8x8xf32>, vector<8x8xf32>, vector<8x8xf32>, vector<8x8xf32> -> vector<8x32xf32>
    %c0_25 = arith.constant 0 : index
    %c0_26 = arith.constant 0 : index
    %c0_27 = arith.constant 0 : index
    %94 = vector.load %arg8[%c0_25, %c0_26, %c0_27] : memref<1x32x32xf32, #tpu.memory_space<vmem>>, vector<1x32x32xf32>
    %95 = vector.shape_cast %94 : vector<1x32x32xf32> to vector<32x32xf32>
    %cst_28 = arith.constant dense<0.000000e+00> : vector<8x32xf32>
    %96 = tpu.matmul %93, %95, %cst_28 {dimension_numbers = #tpu.dot_dimension_numbers<[1], [0], [0], [1], [0, 0, 1, 1], [], []>} : vector<8x32xf32>, vector<32x32xf32>, vector<8x32xf32> -> vector<8x32xf32>
    %c0_29 = arith.constant 0 : index
    %c0_30 = arith.constant 0 : index
    %c0_31 = arith.constant 0 : index
    %97 = vector.load %arg9[%c0_29, %c0_30, %c0_31] : memref<1x1x32xf32, #tpu.memory_space<vmem>>, vector<1x1x32xf32>
    %98 = vector.shape_cast %97 : vector<1x1x32xf32> to vector<1x32xf32>
    %99 = vector.broadcast %98 : vector<1x32xf32> to vector<8x32xf32>
    %100 = arith.addf %96, %99 : vector<8x32xf32>
    %101 = arith.addf %3, %100 : vector<8x32xf32>
    %c0_32 = arith.constant 0 : index
    %c0_33 = arith.constant 0 : index
    %c0_34 = arith.constant 0 : index
    %102 = vector.load %arg10[%c0_32, %c0_33, %c0_34] : memref<1x1x32xf32, #tpu.memory_space<vmem>>, vector<1x1x32xf32>
    %103 = vector.shape_cast %102 : vector<1x1x32xf32> to vector<1x32xf32>
    %c0_35 = arith.constant 0 : index
    %c0_36 = arith.constant 0 : index
    %c0_37 = arith.constant 0 : index
    %104 = vector.load %arg11[%c0_35, %c0_36, %c0_37] : memref<1x1x32xf32, #tpu.memory_space<vmem>>, vector<1x1x32xf32>
    %105 = vector.shape_cast %104 : vector<1x1x32xf32> to vector<1x32xf32>
    %cst_38 = arith.constant dense<0.000000e+00> : vector<8xf32>
    %106 = vector.multi_reduction <add>, %101, %cst_38 [1] : vector<8x32xf32> to vector<8xf32>
    %107 = vector.shape_cast %106 : vector<8xf32> to vector<8x1xf32>
    %cst_39 = arith.constant 3.200000e+01 : f32
    %108 = vector.broadcast %cst_39 : f32 to vector<8x1xf32>
    %109 = arith.divf %107, %108 : vector<8x1xf32>
    %110 = vector.broadcast %109 : vector<8x1xf32> to vector<8x32xf32>
    %111 = arith.subf %101, %110 : vector<8x32xf32>
    %112 = arith.mulf %111, %111 : vector<8x32xf32>
    %cst_40 = arith.constant dense<0.000000e+00> : vector<8xf32>
    %113 = vector.multi_reduction <add>, %112, %cst_40 [1] : vector<8x32xf32> to vector<8xf32>
    %114 = vector.shape_cast %113 : vector<8xf32> to vector<8x1xf32>
    %cst_41 = arith.constant 3.200000e+01 : f32
    %115 = vector.broadcast %cst_41 : f32 to vector<8x1xf32>
    %116 = arith.divf %114, %115 : vector<8x1xf32>
    %117 = vector.broadcast %109 : vector<8x1xf32> to vector<8x32xf32>
    %118 = arith.subf %101, %117 : vector<8x32xf32>
    %cst_42 = arith.constant 9.99999974E-6 : f32
    %119 = vector.broadcast %cst_42 : f32 to vector<8x1xf32>
    %120 = arith.addf %116, %119 : vector<8x1xf32>
    %121 = math.rsqrt %120 : vector<8x1xf32>
    %122 = vector.broadcast %121 : vector<8x1xf32> to vector<8x32xf32>
    %123 = arith.mulf %118, %122 : vector<8x32xf32>
    %124 = vector.broadcast %103 : vector<1x32xf32> to vector<8x32xf32>
    %125 = arith.mulf %123, %124 : vector<8x32xf32>
    %126 = vector.broadcast %105 : vector<1x32xf32> to vector<8x32xf32>
    %127 = arith.addf %125, %126 : vector<8x32xf32>
    %c0_43 = arith.constant 0 : index
    %c0_44 = arith.constant 0 : index
    %c0_45 = arith.constant 0 : index
    %128 = vector.load %arg12[%c0_43, %c0_44, %c0_45] : memref<1x32x128xf32, #tpu.memory_space<vmem>>, vector<1x32x128xf32>
    %129 = vector.shape_cast %128 : vector<1x32x128xf32> to vector<32x128xf32>
    %cst_46 = arith.constant dense<0.000000e+00> : vector<8x128xf32>
    %130 = tpu.matmul %127, %129, %cst_46 {dimension_numbers = #tpu.dot_dimension_numbers<[1], [0], [0], [1], [0, 0, 1, 1], [], []>} : vector<8x32xf32>, vector<32x128xf32>, vector<8x128xf32> -> vector<8x128xf32>
    %c0_47 = arith.constant 0 : index
    %c0_48 = arith.constant 0 : index
    %c0_49 = arith.constant 0 : index
    %131 = vector.load %arg13[%c0_47, %c0_48, %c0_49] : memref<1x1x128xf32, #tpu.memory_space<vmem>>, vector<1x1x128xf32>
    %132 = vector.shape_cast %131 : vector<1x1x128xf32> to vector<1x128xf32>
    %133 = vector.broadcast %132 : vector<1x128xf32> to vector<8x128xf32>
    %134 = arith.addf %130, %133 : vector<8x128xf32>
    %cst_50 = arith.constant 1.702000e+00 : f32
    %135 = vector.broadcast %cst_50 : f32 to vector<8x128xf32>
    %136 = arith.mulf %135, %134 : vector<8x128xf32>
    %137 = arith.negf %136 : vector<8x128xf32>
    %138 = math.exp %137 : vector<8x128xf32>
    %cst_51 = arith.constant 1.000000e+00 : f32
    %139 = vector.broadcast %cst_51 : f32 to vector<8x128xf32>
    %140 = arith.addf %139, %138 : vector<8x128xf32>
    %141 = arith.divf %139, %140 : vector<8x128xf32>
    %142 = arith.mulf %134, %141 : vector<8x128xf32>
    %c0_52 = arith.constant 0 : index
    %c0_53 = arith.constant 0 : index
    %c0_54 = arith.constant 0 : index
    %143 = vector.load %arg14[%c0_52, %c0_53, %c0_54] : memref<1x128x32xf32, #tpu.memory_space<vmem>>, vector<1x128x32xf32>
    %144 = vector.shape_cast %143 : vector<1x128x32xf32> to vector<128x32xf32>
    %cst_55 = arith.constant dense<0.000000e+00> : vector<8x32xf32>
    %145 = tpu.matmul %142, %144, %cst_55 {dimension_numbers = #tpu.dot_dimension_numbers<[1], [0], [0], [1], [0, 0, 1, 1], [], []>} : vector<8x128xf32>, vector<128x32xf32>, vector<8x32xf32> -> vector<8x32xf32>
    %c0_56 = arith.constant 0 : index
    %c0_57 = arith.constant 0 : index
    %c0_58 = arith.constant 0 : index
    %146 = vector.load %arg15[%c0_56, %c0_57, %c0_58] : memref<1x1x32xf32, #tpu.memory_space<vmem>>, vector<1x1x32xf32>
    %147 = vector.shape_cast %146 : vector<1x1x32xf32> to vector<1x32xf32>
    %148 = vector.broadcast %147 : vector<1x32xf32> to vector<8x32xf32>
    %149 = arith.addf %145, %148 : vector<8x32xf32>
    %150 = arith.addf %101, %149 : vector<8x32xf32>
    %c0_59 = arith.constant 0 : index
    %c0_60 = arith.constant 0 : index
    %151 = vector.load %arg20[%c0_59, %c0_60] : memref<8x32xf32, #tpu.memory_space<vmem>>, vector<8x32xf32>
    tpu.vector_store %arg20[%c0_59, %c0_60], %150 {strides = array<i32>} : memref<8x32xf32, #tpu.memory_space<vmem>>, vector<8x32xf32>,
    %c1_i32 = arith.constant 1 : i32
    %152 = arith.cmpi eq, %arg1, %c1_i32 : i32
    %153 = arith.extui %152 : i1 to i32
    %c0_i32_61 = arith.constant 0 : i32
    %154 = arith.cmpi ne, %153, %c0_i32_61 : i32
    scf.if %154 {
      %155 = arith.index_cast %arg0 : i32 to index
      %156 = memref.load %arg2[%155] : memref<2xi32, #tpu.memory_space<smem>>
      %157 = tpu.iota {dimensions = array<i32: 0>} : vector<8x1xi32>
      %158 = vector.broadcast %156 : i32 to vector<8x1xi32>
      %159 = arith.cmpi eq, %157, %158 : vector<8x1xi32>
      %160 = arith.extui %159 : vector<8x1xi1> to vector<8x1xi32>
      %161 = arith.sitofp %160 : vector<8x1xi32> to vector<8x1xf32>
      %162 = vector.broadcast %161 : vector<8x1xf32> to vector<8x32xf32>
      %163 = arith.mulf %150, %162 : vector<8x32xf32>
      %cst_62 = arith.constant dense<0.000000e+00> : vector<32xf32>
      %164 = vector.multi_reduction <add>, %163, %cst_62 [0] : vector<8x32xf32> to vector<32xf32>
      %165 = vector.shape_cast %164 : vector<32xf32> to vector<1x32xf32>
      %c0_63 = arith.constant 0 : index
      %c0_64 = arith.constant 0 : index
      %166 = vector.load %arg16[%c0_63, %c0_64] : memref<1x32xf32, #tpu.memory_space<vmem>>, vector<1x32xf32>
      %c0_65 = arith.constant 0 : index
      %c0_66 = arith.constant 0 : index
      %167 = vector.load %arg17[%c0_65, %c0_66] : memref<1x32xf32, #tpu.memory_space<vmem>>, vector<1x32xf32>
      %cst_67 = arith.constant dense<0.000000e+00> : vector<1xf32>
      %168 = vector.multi_reduction <add>, %165, %cst_67 [1] : vector<1x32xf32> to vector<1xf32>
      %169 = vector.shape_cast %168 : vector<1xf32> to vector<1x1xf32>
      %cst_68 = arith.constant 3.200000e+01 : f32
      %170 = vector.broadcast %cst_68 : f32 to vector<1x1xf32>
      %171 = arith.divf %169, %170 : vector<1x1xf32>
      %172 = vector.broadcast %171 : vector<1x1xf32> to vector<1x32xf32>
      %173 = arith.subf %165, %172 : vector<1x32xf32>
      %174 = arith.mulf %173, %173 : vector<1x32xf32>
      %cst_69 = arith.constant dense<0.000000e+00> : vector<1xf32>
      %175 = vector.multi_reduction <add>, %174, %cst_69 [1] : vector<1x32xf32> to vector<1xf32>
      %176 = vector.shape_cast %175 : vector<1xf32> to vector<1x1xf32>
      %cst_70 = arith.constant 3.200000e+01 : f32
      %177 = vector.broadcast %cst_70 : f32 to vector<1x1xf32>
      %178 = arith.divf %176, %177 : vector<1x1xf32>
      %179 = vector.broadcast %171 : vector<1x1xf32> to vector<1x32xf32>
      %180 = arith.subf %165, %179 : vector<1x32xf32>
      %cst_71 = arith.constant 9.99999974E-6 : f32
      %181 = vector.broadcast %cst_71 : f32 to vector<1x1xf32>
      %182 = arith.addf %178, %181 : vector<1x1xf32>
      %183 = math.rsqrt %182 : vector<1x1xf32>
      %184 = vector.broadcast %183 : vector<1x1xf32> to vector<1x32xf32>
      %185 = arith.mulf %180, %184 : vector<1x32xf32>
      %186 = arith.mulf %185, %166 : vector<1x32xf32>
      %187 = arith.addf %186, %167 : vector<1x32xf32>
      %c0_72 = arith.constant 0 : index
      %c0_73 = arith.constant 0 : index
      %188 = vector.load %arg18[%c0_72, %c0_73] : memref<32x16xf32, #tpu.memory_space<vmem>>, vector<32x16xf32>
      %cst_74 = arith.constant dense<0.000000e+00> : vector<1x16xf32>
      %189 = tpu.matmul %187, %188, %cst_74 {dimension_numbers = #tpu.dot_dimension_numbers<[1], [0], [0], [1], [0, 0, 1, 1], [], []>} : vector<1x32xf32>, vector<32x16xf32>, vector<1x16xf32> -> vector<1x16xf32>
      %c0_75 = arith.constant 0 : index
      %c0_76 = arith.constant 0 : index
      %c0_77 = arith.constant 0 : index
      %190 = vector.load %arg19[%c0_75, %c0_76, %c0_77] : memref<1x1x16xf32, #tpu.memory_space<vmem>>, vector<1x1x16xf32>
      %191 = vector.shape_cast %190 : vector<1x1x16xf32> to vector<1x16xf32>
      %192 = vector.shape_cast %189 : vector<1x16xf32> to vector<1x1x16xf32>
      tpu.vector_store %arg19[%c0_75, %c0_76, %c0_77], %192 {strides = array<i32>} : memref<1x1x16xf32, #tpu.memory_space<vmem>>, vector<1x1x16xf32>,
    } else {
    }
    return
  }
  func.func @transform_0(%arg0: i32, %arg1: i32, %arg2: memref<2xi32, #tpu.memory_space<smem>>) -> (i32, i32, i32) {
    %c0_i32 = arith.constant 0 : i32
    %c0_i32_0 = arith.constant 0 : i32
    %c0_i32_1 = arith.constant 0 : i32
    return %arg0, %c0_i32, %c0_i32_0 : i32, i32, i32
  }
  func.func @transform_1(%arg0: i32, %arg1: i32, %arg2: memref<2xi32, #tpu.memory_space<smem>>) -> (i32, i32, i32) {
    %c0_i32 = arith.constant 0 : i32
    %c0_i32_0 = arith.constant 0 : i32
    %c0_i32_1 = arith.constant 0 : i32
    return %arg1, %c0_i32, %c0_i32_0 : i32, i32, i32
  }
  func.func @transform_2(%arg0: i32, %arg1: i32, %arg2: memref<2xi32, #tpu.memory_space<smem>>) -> (i32, i32, i32) {
    %c0_i32 = arith.constant 0 : i32
    %c0_i32_0 = arith.constant 0 : i32
    %c0_i32_1 = arith.constant 0 : i32
    return %arg1, %c0_i32, %c0_i32_0 : i32, i32, i32
  }
  func.func @transform_3(%arg0: i32, %arg1: i32, %arg2: memref<2xi32, #tpu.memory_space<smem>>) -> (i32, i32, i32) {
    %c0_i32 = arith.constant 0 : i32
    %c0_i32_0 = arith.constant 0 : i32
    %c0_i32_1 = arith.constant 0 : i32
    return %arg1, %c0_i32, %c0_i32_0 : i32, i32, i32
  }
  func.func @transform_4(%arg0: i32, %arg1: i32, %arg2: memref<2xi32, #tpu.memory_space<smem>>) -> (i32, i32, i32) {
    %c0_i32 = arith.constant 0 : i32
    %c0_i32_0 = arith.constant 0 : i32
    %c0_i32_1 = arith.constant 0 : i32
    return %arg1, %c0_i32, %c0_i32_0 : i32, i32, i32
  }
  func.func @transform_5(%arg0: i32, %arg1: i32, %arg2: memref<2xi32, #tpu.memory_space<smem>>) -> (i32, i32, i32) {
    %c0_i32 = arith.constant 0 : i32
    %c0_i32_0 = arith.constant 0 : i32
    %c0_i32_1 = arith.constant 0 : i32
    return %arg1, %c0_i32, %c0_i32_0 : i32, i32, i32
  }
  func.func @transform_6(%arg0: i32, %arg1: i32, %arg2: memref<2xi32, #tpu.memory_space<smem>>) -> (i32, i32, i32) {
    %c0_i32 = arith.constant 0 : i32
    %c0_i32_0 = arith.constant 0 : i32
    %c0_i32_1 = arith.constant 0 : i32
    return %arg1, %c0_i32, %c0_i32_0 : i32, i32, i32
  }
  func.func @transform_7(%arg0: i32, %arg1: i32, %arg2: memref<2xi32, #tpu.memory_space<smem>>) -> (i32, i32, i32) {
    %c0_i32 = arith.constant 0 : i32
    %c0_i32_0 = arith.constant 0 : i32
    %c0_i32_1 = arith.constant 0 : i32
    return %arg1, %c0_i32, %c0_i32_0 : i32, i32, i32
  }
  func.func @transform_8(%arg0: i32, %arg1: i32, %arg2: memref<2xi32, #tpu.memory_space<smem>>) -> (i32, i32, i32) {
    %c0_i32 = arith.constant 0 : i32
    %c0_i32_0 = arith.constant 0 : i32
    %c0_i32_1 = arith.constant 0 : i32
    return %arg1, %c0_i32, %c0_i32_0 : i32, i32, i32
  }
  func.func @transform_9(%arg0: i32, %arg1: i32, %arg2: memref<2xi32, #tpu.memory_space<smem>>) -> (i32, i32, i32) {
    %c0_i32 = arith.constant 0 : i32
    %c0_i32_0 = arith.constant 0 : i32
    %c0_i32_1 = arith.constant 0 : i32
    return %arg1, %c0_i32, %c0_i32_0 : i32, i32, i32
  }
  func.func @transform_10(%arg0: i32, %arg1: i32, %arg2: memref<2xi32, #tpu.memory_space<smem>>) -> (i32, i32, i32) {
    %c0_i32 = arith.constant 0 : i32
    %c0_i32_0 = arith.constant 0 : i32
    %c0_i32_1 = arith.constant 0 : i32
    return %arg1, %c0_i32, %c0_i32_0 : i32, i32, i32
  }
  func.func @transform_11(%arg0: i32, %arg1: i32, %arg2: memref<2xi32, #tpu.memory_space<smem>>) -> (i32, i32, i32) {
    %c0_i32 = arith.constant 0 : i32
    %c0_i32_0 = arith.constant 0 : i32
    %c0_i32_1 = arith.constant 0 : i32
    return %arg1, %c0_i32, %c0_i32_0 : i32, i32, i32
  }
  func.func @transform_12(%arg0: i32, %arg1: i32, %arg2: memref<2xi32, #tpu.memory_space<smem>>) -> (i32, i32, i32) {
    %c0_i32 = arith.constant 0 : i32
    %c0_i32_0 = arith.constant 0 : i32
    %c0_i32_1 = arith.constant 0 : i32
    return %arg1, %c0_i32, %c0_i32_0 : i32, i32, i32
  }
  func.func @transform_13(%arg0: i32, %arg1: i32, %arg2: memref<2xi32, #tpu.memory_space<smem>>) -> (i32, i32) {
    %c0_i32 = arith.constant 0 : i32
    %c0_i32_0 = arith.constant 0 : i32
    %c0_i32_1 = arith.constant 0 : i32
    return %c0_i32, %c0_i32_0 : i32, i32
  }
  func.func @transform_14(%arg0: i32, %arg1: i32, %arg2: memref<2xi32, #tpu.memory_space<smem>>) -> (i32, i32) {
    %c0_i32 = arith.constant 0 : i32
    %c0_i32_0 = arith.constant 0 : i32
    %c0_i32_1 = arith.constant 0 : i32
    return %c0_i32, %c0_i32_0 : i32, i32
  }
  func.func @transform_15(%arg0: i32, %arg1: i32, %arg2: memref<2xi32, #tpu.memory_space<smem>>) -> (i32, i32) {
    %c0_i32 = arith.constant 0 : i32
    %c0_i32_0 = arith.constant 0 : i32
    %c0_i32_1 = arith.constant 0 : i32
    return %c0_i32, %c0_i32_0 : i32, i32
  }
  func.func @transform_16(%arg0: i32, %arg1: i32, %arg2: memref<2xi32, #tpu.memory_space<smem>>) -> (i32, i32, i32) {
    %c0_i32 = arith.constant 0 : i32
    %c0_i32_0 = arith.constant 0 : i32
    %c0_i32_1 = arith.constant 0 : i32
    return %arg0, %c0_i32, %c0_i32_0 : i32, i32, i32
  }
}

</mosaic_0001>

<llo_original>
// kernel: text_encoder_forward.1
$region0: #{text_encoder_forward.1}
  #allocation0 [shape = 'u32[]', space=smem, size = 0x4, offset = 0x4, fixed_abs, tag = 'smem constant byte address 0x4 - core index']
  #allocation1 [shape = 'u32[144,128]{1,0:T(1,128)}', space=vmem, size = 0x12000, scoped, tag = 'internal scratch']
  #allocation2 [shape = 'f32[8,32]{1,0:T(8,128)}', space=vmem, size = 0x1000, scoped, tag = 'scratch operand']
  #allocation3 [shape = 's32[1]{0}', space=sflag, size = 0x4, scoped, tag = 'scoped memory for text_encoder_forward.1']
  #allocation4 [shape = 'u8[512]{0}', space=smem, size = 0x200, scoped, tag = 'prefetched SMEM operand 0']
  %s0 = inlined_call_operand.vmem [shape: s32[2], index: 0, kind: input, shape index: {}]
  %s1 = inlined_call_operand.vmem [shape: f32[2,8,32], index: 1, kind: input, shape index: {}]
  %s2 = inlined_call_operand.vmem [shape: f32[2,1,32], index: 2, kind: input, shape index: {}]
  %s3 = inlined_call_operand.vmem [shape: f32[2,1,32], index: 3, kind: input, shape index: {}]
  %s4 = inlined_call_operand.vmem [shape: f32[2,32,96], index: 4, kind: input, shape index: {}]
  %s5 = inlined_call_operand.vmem [shape: f32[2,1,96], index: 5, kind: input, shape index: {}]
  %s6 = inlined_call_operand.vmem [shape: f32[2,32,32], index: 6, kind: input, shape index: {}]
  %s7 = inlined_call_operand.vmem [shape: f32[2,1,32], index: 7, kind: input, shape index: {}]
  %s8 = inlined_call_operand.vmem [shape: f32[2,1,32], index: 8, kind: input, shape index: {}]
  %s9 = inlined_call_operand.vmem [shape: f32[2,1,32], index: 9, kind: input, shape index: {}]
  %s10 = inlined_call_operand.vmem [shape: f32[2,32,128], index: 10, kind: input, shape index: {}]
  %s11 = inlined_call_operand.vmem [shape: f32[2,1,128], index: 11, kind: input, shape index: {}]
  %s12 = inlined_call_operand.vmem [shape: f32[2,128,32], index: 12, kind: input, shape index: {}]
  %s13 = inlined_call_operand.vmem [shape: f32[2,1,32], index: 13, kind: input, shape index: {}]
  %s14 = inlined_call_operand.vmem [shape: f32[1,32], index: 14, kind: input, shape index: {}]
  %s15 = inlined_call_operand.vmem [shape: f32[1,32], index: 15, kind: input, shape index: {}]
  %s16 = inlined_call_operand.vmem [shape: f32[32,16], index: 16, kind: input, shape index: {}]
  %s17 = inlined_call_operand.hbm [shape: f32[2,1,16], index: 17, kind: output, shape index: {}]
  %s18 = sld [smem:[#allocation0]]
  $region105: #{text_encoder_forward.1} parent=0
    _
  %s20 = ssub.s32 1, %s18
  %s21 = scalar_select 0, %s20, %s18
  %s22 = sshll.u32 %s0, 4
  %s23 = int_to_ptr.vmem [resolvable:$true] %s22
  %25 = dma.vmem_to_smem %s23, 16, [#allocation4], [#allocation3]
  %26 = dma.done [#allocation3], 16
  %27 = sfence
  $region1: #{text_encoder_forward.1} parent=0
    #allocation5 [shape = 'u8[1024]{0}', space=vmem, size = 0x400, scoped, tag = 'output window, operand 0']
    #allocation6 [shape = 's32[2]{0}', space=sflag, size = 0x8, scoped, tag = 'scoped memory for text_encoder_forward.1']
    %28 = vsyncpa [#allocation6], 0
    %s29 = scalar_lea.sflag [#allocation6], 1
    %30 = vsyncpa %s29, 0
    loop: start=0, step=1, limit=6
    $region2: #{text_encoder_forward.1} parent=1 // loop_pre_header
      _
    $region3: #{text_encoder_forward.1} parent=1 // loop_header
      %s32 = sphi 0, %s36
      %p33 = scmp.ge.s32.totalorder %s32, 6
      %s39 = sphi 0, %s51
      %s40 = sphi 0, %s47
      %s41 = sphi 0, %s39
      %s42 = sphi 0, %s40
      %s43 = sphi 0, %s41
      %s44 = sphi 0, %s42
      %s54 = sphi 0, %s56
      %s57 = sphi 0, %s54
      %s58 = sphi 0, %s57
      %s74 = sphi 0, %s58
      %s80 = sphi 0, %s82
      %s83 = sphi 0, %s80
      %s84 = sphi 0, %s83
      %s100 = sphi 0, %s84
      %s106 = sphi 0, %s108
      %s109 = sphi 0, %s106
      %s110 = sphi 0, %s109
      %s126 = sphi 0, %s110
      %s132 = sphi 0, %s134
      %s135 = sphi 0, %s132
      %s136 = sphi 0, %s135
      %s152 = sphi 0, %s136
      %s158 = sphi 0, %s160
      %s161 = sphi 0, %s158
      %s162 = sphi 0, %s161
      %s178 = sphi 0, %s162
      %s184 = sphi 0, %s186
      %s187 = sphi 0, %s184
      %s188 = sphi 0, %s187
      %s204 = sphi 0, %s188
      %s210 = sphi 0, %s212
      %s213 = sphi 0, %s210
      %s214 = sphi 0, %s213
      %s230 = sphi 0, %s214
      %s236 = sphi 0, %s238
      %s239 = sphi 0, %s236
      %s240 = sphi 0, %s239
      %s256 = sphi 0, %s240
      %s262 = sphi 0, %s264
      %s265 = sphi 0, %s262
      %s266 = sphi 0, %s265
      %s282 = sphi 0, %s266
      %s288 = sphi 0, %s290
      %s291 = sphi 0, %s288
      %s292 = sphi 0, %s291
      %s308 = sphi 0, %s292
      %s314 = sphi 0, %s316
      %s317 = sphi 0, %s314
      %s318 = sphi 0, %s317
      %s334 = sphi 0, %s318
      %s340 = sphi 0, %s342
      %s343 = sphi 0, %s340
      %s344 = sphi 0, %s343
      %s360 = sphi 0, %s344
      %s366 = sphi 0, %s368
      %s369 = sphi 0, %s366
      %s370 = sphi 0, %s369
      %s386 = sphi 0, %s370
      %s390 = sphi 0, %s390
      %s392 = sphi 0, %s390
      %s393 = sphi 0, %s392
      %s407 = sphi 0, %s393
      %s411 = sphi 0, %s411
      %s413 = sphi 0, %s411
      %s414 = sphi 0, %s413
      %s428 = sphi 0, %s414
      %s432 = sphi 0, %s432
      %s434 = sphi 0, %s432
      %s435 = sphi 0, %s434
      %s449 = sphi 0, %s435
      %s455 = sphi 0, %s457
      %s458 = sphi 0, %s455
      %s459 = sphi 0, %s458
      %s475 = sphi 0, %s459
    $region4: #{text_encoder_forward.1} parent=1 // loop_header_branch
      %35 = sbr.rel (%p33) target = $region8
    $region5: #{text_encoder_forward.1} parent=1 // loop_body
      %s37 = ssub.s32 %s32, 1
      %s38 = ssub.s32 %s32, 2
      %s45 = sadd.s32 1, %s40
      %p46 = scmp.ge.s32.totalorder %s45, 2
      %s47 = scalar_select %p46, 0, %s45
      %s48 = sadd.s32 1, %s39
      %s49 = scalar_select %p46, %s48, %s39
      %p50 = scmp.ge.s32.totalorder %s49, 2
      %s51 = scalar_select %p50, 0, %s49
      %s52 = ssub.s32 %s39, %s51
      %p53 = scmp.eq.s32.totalorder %s52, 0
      %s55 = sadd.s32 %s54, 1
      %s56 = scalar_select %p53, %s54, %s55
      %p59 = pneg %p53
      %p60 = scmp.eq.s32.totalorder %s32, 3
      %p61 = por %p59, %p60
      %p62 = scmp.ne.s32.totalorder %s54, %s57
      %p63 = scmp.eq.s32.totalorder %s32, 0
      %p64 = por %p62, %p63
      %p65 = scmp.ne.s32.totalorder %s54, %s57
      %p66 = scmp.eq.s32.totalorder %s37, 3
      %p67 = por %p65, %p66
      %p68 = scmp.ne.s32.totalorder %s57, %s58
      %p69 = scmp.eq.s32.totalorder %s37, 0
      %p70 = por %p68, %p69
      %p71 = scmp.ne.s32.totalorder %s57, %s58
      %p72 = scmp.eq.s32.totalorder %s38, 3
      %p73 = por %p71, %p72
      %p75 = scmp.ne.s32.totalorder %s58, %s74
      %p76 = scmp.eq.s32.totalorder %s38, 0
      %p77 = por %p75, %p76
      %s78 = ssub.s32 %s40, %s47
      %p79 = scmp.eq.s32.totalorder %s78, 0
      %s81 = sadd.s32 %s80, 1
      %s82 = scalar_select %p79, %s80, %s81
      %p85 = pneg %p79
      %p86 = scmp.eq.s32.totalorder %s32, 3
      %p87 = por %p85, %p86
      %p88 = scmp.ne.s32.totalorder %s80, %s83
      %p89 = scmp.eq.s32.totalorder %s32, 0
      %p90 = por %p88, %p89
      %p91 = scmp.ne.s32.totalorder %s80, %s83
      %p92 = scmp.eq.s32.totalorder %s37, 3
      %p93 = por %p91, %p92
      %p94 = scmp.ne.s32.totalorder %s83, %s84
      %p95 = scmp.eq.s32.totalorder %s37, 0
      %p96 = por %p94, %p95
      %p97 = scmp.ne.s32.totalorder %s83, %s84
      %p98 = scmp.eq.s32.totalorder %s38, 3
      %p99 = por %p97, %p98
      %p101 = scmp.ne.s32.totalorder %s84, %s100
      %p102 = scmp.eq.s32.totalorder %s38, 0
      %p103 = por %p101, %p102
      %s104 = ssub.s32 %s40, %s47
      %p105 = scmp.eq.s32.totalorder %s104, 0
      %s107 = sadd.s32 %s106, 1
      %s108 = scalar_select %p105, %s106, %s107
      %p111 = pneg %p105
      %p112 = scmp.eq.s32.totalorder %s32, 3
      %p113 = por %p111, %p112
      %p114 = scmp.ne.s32.totalorder %s106, %s109
      %p115 = scmp.eq.s32.totalorder %s32, 0
      %p116 = por %p114, %p115
      %p117 = scmp.ne.s32.totalorder %s106, %s109
      %p118 = scmp.eq.s32.totalorder %s37, 3
      %p119 = por %p117, %p118
      %p120 = scmp.ne.s32.totalorder %s109, %s110
      %p121 = scmp.eq.s32.totalorder %s37, 0
      %p122 = por %p120, %p121
      %p123 = scmp.ne.s32.totalorder %s109, %s110
      %p124 = scmp.eq.s32.totalorder %s38, 3
      %p125 = por %p123, %p124
      %p127 = scmp.ne.s32.totalorder %s110, %s126
      %p128 = scmp.eq.s32.totalorder %s38, 0
      %p129 = por %p127, %p128
      %s130 = ssub.s32 %s40, %s47
      %p131 = scmp.eq.s32.totalorder %s130, 0
      %s133 = sadd.s32 %s132, 1
      %s134 = scalar_select %p131, %s132, %s133
      %p137 = pneg %p131
      %p138 = scmp.eq.s32.totalorder %s32, 3
      %p139 = por %p137, %p138
      %p140 = scmp.ne.s32.totalorder %s132, %s135
      %p141 = scmp.eq.s32.totalorder %s32, 0
      %p142 = por %p140, %p141
      %p143 = scmp.ne.s32.totalorder %s132, %s135
      %p144 = scmp.eq.s32.totalorder %s37, 3
      %p145 = por %p143, %p144
      %p146 = scmp.ne.s32.totalorder %s135, %s136
      %p147 = scmp.eq.s32.totalorder %s37, 0
      %p148 = por %p146, %p147
      %p149 = scmp.ne.s32.totalorder %s135, %s136
      %p150 = scmp.eq.s32.totalorder %s38, 3
      %p151 = por %p149, %p150
      %p153 = scmp.ne.s32.totalorder %s136, %s152
      %p154 = scmp.eq.s32.totalorder %s38, 0
      %p155 = por %p153, %p154
      %s156 = ssub.s32 %s40, %s47
      %p157 = scmp.eq.s32.totalorder %s156, 0
      %s159 = sadd.s32 %s158, 1
      %s160 = scalar_select %p157, %s158, %s159
      %p163 = pneg %p157
      %p164 = scmp.eq.s32.totalorder %s32, 3
      %p165 = por %p163, %p164
      %p166 = scmp.ne.s32.totalorder %s158, %s161
      %p167 = scmp.eq.s32.totalorder %s32, 0
      %p168 = por %p166, %p167
      %p169 = scmp.ne.s32.totalorder %s158, %s161
      %p170 = scmp.eq.s32.totalorder %s37, 3
      %p171 = por %p169, %p170
      %p172 = scmp.ne.s32.totalorder %s161, %s162
      %p173 = scmp.eq.s32.totalorder %s37, 0
      %p174 = por %p172, %p173
      %p175 = scmp.ne.s32.totalorder %s161, %s162
      %p176 = scmp.eq.s32.totalorder %s38, 3
      %p177 = por %p175, %p176
      %p179 = scmp.ne.s32.totalorder %s162, %s178
      %p180 = scmp.eq.s32.totalorder %s38, 0
      %p181 = por %p179, %p180
      %s182 = ssub.s32 %s40, %s47
      %p183 = scmp.eq.s32.totalorder %s182, 0
      %s185 = sadd.s32 %s184, 1
      %s186 = scalar_select %p183, %s184, %s185
      %p189 = pneg %p183
      %p190 = scmp.eq.s32.totalorder %s32, 3
      %p191 = por %p189, %p190
      %p192 = scmp.ne.s32.totalorder %s184, %s187
      %p193 = scmp.eq.s32.totalorder %s32, 0
      %p194 = por %p192, %p193
      %p195 = scmp.ne.s32.totalorder %s184, %s187
      %p196 = scmp.eq.s32.totalorder %s37, 3
      %p197 = por %p195, %p196
      %p198 = scmp.ne.s32.totalorder %s187, %s188
      %p199 = scmp.eq.s32.totalorder %s37, 0
      %p200 = por %p198, %p199
      %p201 = scmp.ne.s32.totalorder %s187, %s188
      %p202 = scmp.eq.s32.totalorder %s38, 3
      %p203 = por %p201, %p202
      %p205 = scmp.ne.s32.totalorder %s188, %s204
      %p206 = scmp.eq.s32.totalorder %s38, 0
      %p207 = por %p205, %p206
      %s208 = ssub.s32 %s40, %s47
      %p209 = scmp.eq.s32.totalorder %s208, 0
      %s211 = sadd.s32 %s210, 1
      %s212 = scalar_select %p209, %s210, %s211
      %p215 = pneg %p209
      %p216 = scmp.eq.s32.totalorder %s32, 3
      %p217 = por %p215, %p216
      %p218 = scmp.ne.s32.totalorder %s210, %s213
      %p219 = scmp.eq.s32.totalorder %s32, 0
      %p220 = por %p218, %p219
      %p221 = scmp.ne.s32.totalorder %s210, %s213
      %p222 = scmp.eq.s32.totalorder %s37, 3
      %p223 = por %p221, %p222
      %p224 = scmp.ne.s32.totalorder %s213, %s214
      %p225 = scmp.eq.s32.totalorder %s37, 0
      %p226 = por %p224, %p225
      %p227 = scmp.ne.s32.totalorder %s213, %s214
      %p228 = scmp.eq.s32.totalorder %s38, 3
      %p229 = por %p227, %p228
      %p231 = scmp.ne.s32.totalorder %s214, %s230
      %p232 = scmp.eq.s32.totalorder %s38, 0
      %p233 = por %p231, %p232
      %s234 = ssub.s32 %s40, %s47
      %p235 = scmp.eq.s32.totalorder %s234, 0
      %s237 = sadd.s32 %s236, 1
      %s238 = scalar_select %p235, %s236, %s237
      %p241 = pneg %p235
      %p242 = scmp.eq.s32.totalorder %s32, 3
      %p243 = por %p241, %p242
      %p244 = scmp.ne.s32.totalorder %s236, %s239
      %p245 = scmp.eq.s32.totalorder %s32, 0
      %p246 = por %p244, %p245
      %p247 = scmp.ne.s32.totalorder %s236, %s239
      %p248 = scmp.eq.s32.totalorder %s37, 3
      %p249 = por %p247, %p248
      %p250 = scmp.ne.s32.totalorder %s239, %s240
      %p251 = scmp.eq.s32.totalorder %s37, 0
      %p252 = por %p250, %p251
      %p253 = scmp.ne.s32.totalorder %s239, %s240
      %p254 = scmp.eq.s32.totalorder %s38, 3
      %p255 = por %p253, %p254
      %p257 = scmp.ne.s32.totalorder %s240, %s256
      %p258 = scmp.eq.s32.totalorder %s38, 0
      %p259 = por %p257, %p258
      %s260 = ssub.s32 %s40, %s47
      %p261 = scmp.eq.s32.totalorder %s260, 0
      %s263 = sadd.s32 %s262, 1
      %s264 = scalar_select %p261, %s262, %s263
      %p267 = pneg %p261
      %p268 = scmp.eq.s32.totalorder %s32, 3
      %p269 = por %p267, %p268
      %p270 = scmp.ne.s32.totalorder %s262, %s265
      %p271 = scmp.eq.s32.totalorder %s32, 0
      %p272 = por %p270, %p271
      %p273 = scmp.ne.s32.totalorder %s262, %s265
      %p274 = scmp.eq.s32.totalorder %s37, 3
      %p275 = por %p273, %p274
      %p276 = scmp.ne.s32.totalorder %s265, %s266
      %p277 = scmp.eq.s32.totalorder %s37, 0
      %p278 = por %p276, %p277
      %p279 = scmp.ne.s32.totalorder %s265, %s266
      %p280 = scmp.eq.s32.totalorder %s38, 3
      %p281 = por %p279, %p280
      %p283 = scmp.ne.s32.totalorder %s266, %s282
      %p284 = scmp.eq.s32.totalorder %s38, 0
      %p285 = por %p283, %p284
      %s286 = ssub.s32 %s40, %s47
      %p287 = scmp.eq.s32.totalorder %s286, 0
      %s289 = sadd.s32 %s288, 1
      %s290 = scalar_select %p287, %s288, %s289
      %p293 = pneg %p287
      %p294 = scmp.eq.s32.totalorder %s32, 3
      %p295 = por %p293, %p294
      %p296 = scmp.ne.s32.totalorder %s288, %s291
      %p297 = scmp.eq.s32.totalorder %s32, 0
      %p298 = por %p296, %p297
      %p299 = scmp.ne.s32.totalorder %s288, %s291
      %p300 = scmp.eq.s32.totalorder %s37, 3
      %p301 = por %p299, %p300
      %p302 = scmp.ne.s32.totalorder %s291, %s292
      %p303 = scmp.eq.s32.totalorder %s37, 0
      %p304 = por %p302, %p303
      %p305 = scmp.ne.s32.totalorder %s291, %s292
      %p306 = scmp.eq.s32.totalorder %s38, 3
      %p307 = por %p305, %p306
      %p309 = scmp.ne.s32.totalorder %s292, %s308
      %p310 = scmp.eq.s32.totalorder %s38, 0
      %p311 = por %p309, %p310
      %s312 = ssub.s32 %s40, %s47
      %p313 = scmp.eq.s32.totalorder %s312, 0
      %s315 = sadd.s32 %s314, 1
      %s316 = scalar_select %p313, %s314, %s315
      %p319 = pneg %p313
      %p320 = scmp.eq.s32.totalorder %s32, 3
      %p321 = por %p319, %p320
      %p322 = scmp.ne.s32.totalorder %s314, %s317
      %p323 = scmp.eq.s32.totalorder %s32, 0
      %p324 = por %p322, %p323
      %p325 = scmp.ne.s32.totalorder %s314, %s317
      %p326 = scmp.eq.s32.totalorder %s37, 3
      %p327 = por %p325, %p326
      %p328 = scmp.ne.s32.totalorder %s317, %s318
      %p329 = scmp.eq.s32.totalorder %s37, 0
      %p330 = por %p328, %p329
      %p331 = scmp.ne.s32.totalorder %s317, %s318
      %p332 = scmp.eq.s32.totalorder %s38, 3
      %p333 = por %p331, %p332
      %p335 = scmp.ne.s32.totalorder %s318, %s334
      %p336 = scmp.eq.s32.totalorder %s38, 0
      %p337 = por %p335, %p336
      %s338 = ssub.s32 %s40, %s47
      %p339 = scmp.eq.s32.totalorder %s338, 0
      %s341 = sadd.s32 %s340, 1
      %s342 = scalar_select %p339, %s340, %s341
      %p345 = pneg %p339
      %p346 = scmp.eq.s32.totalorder %s32, 3
      %p347 = por %p345, %p346
      %p348 = scmp.ne.s32.totalorder %s340, %s343
      %p349 = scmp.eq.s32.totalorder %s32, 0
      %p350 = por %p348, %p349
      %p351 = scmp.ne.s32.totalorder %s340, %s343
      %p352 = scmp.eq.s32.totalorder %s37, 3
      %p353 = por %p351, %p352
      %p354 = scmp.ne.s32.totalorder %s343, %s344
      %p355 = scmp.eq.s32.totalorder %s37, 0
      %p356 = por %p354, %p355
      %p357 = scmp.ne.s32.totalorder %s343, %s344
      %p358 = scmp.eq.s32.totalorder %s38, 3
      %p359 = por %p357, %p358
      %p361 = scmp.ne.s32.totalorder %s344, %s360
      %p362 = scmp.eq.s32.totalorder %s38, 0
      %p363 = por %p361, %p362
      %s364 = ssub.s32 %s40, %s47
      %p365 = scmp.eq.s32.totalorder %s364, 0
      %s367 = sadd.s32 %s366, 1
      %s368 = scalar_select %p365, %s366, %s367
      %p371 = pneg %p365
      %p372 = scmp.eq.s32.totalorder %s32, 3
      %p373 = por %p371, %p372
      %p374 = scmp.ne.s32.totalorder %s366, %s369
      %p375 = scmp.eq.s32.totalorder %s32, 0
      %p376 = por %p374, %p375
      %p377 = scmp.ne.s32.totalorder %s366, %s369
      %p378 = scmp.eq.s32.totalorder %s37, 3
      %p379 = por %p377, %p378
      %p380 = scmp.ne.s32.totalorder %s369, %s370
      %p381 = scmp.eq.s32.totalorder %s37, 0
      %p382 = por %p380, %p381
      %p383 = scmp.ne.s32.totalorder %s369, %s370
      %p384 = scmp.eq.s32.totalorder %s38, 3
      %p385 = por %p383, %p384
      %p387 = scmp.ne.s32.totalorder %s370, %s386
      %p388 = scmp.eq.s32.totalorder %s38, 0
      %p389 = por %p387, %p388
      %s391 = sadd.s32 %s390, 1
      %p394 = scmp.eq.s32.totalorder %s32, 3
      %p395 = scmp.ne.s32.totalorder %s390, %s392
      %p396 = scmp.eq.s32.totalorder %s32, 0
      %p397 = por %p395, %p396
      %p398 = scmp.ne.s32.totalorder %s390, %s392
      %p399 = scmp.eq.s32.totalorder %s37, 3
      %p400 = por %p398, %p399
      %p401 = scmp.ne.s32.totalorder %s392, %s393
      %p402 = scmp.eq.s32.totalorder %s37, 0
      %p403 = por %p401, %p402
      %p404 = scmp.ne.s32.totalorder %s392, %s393
      %p405 = scmp.eq.s32.totalorder %s38, 3
      %p406 = por %p404, %p405
      %p408 = scmp.ne.s32.totalorder %s393, %s407
      %p409 = scmp.eq.s32.totalorder %s38, 0
      %p410 = por %p408, %p409
      %s412 = sadd.s32 %s411, 1
      %p415 = scmp.eq.s32.totalorder %s32, 3
      %p416 = scmp.ne.s32.totalorder %s411, %s413
      %p417 = scmp.eq.s32.totalorder %s32, 0
      %p418 = por %p416, %p417
      %p419 = scmp.ne.s32.totalorder %s411, %s413
      %p420 = scmp.eq.s32.totalorder %s37, 3
      %p421 = por %p419, %p420
      %p422 = scmp.ne.s32.totalorder %s413, %s414
      %p423 = scmp.eq.s32.totalorder %s37, 0
      %p424 = por %p422, %p423
      %p425 = scmp.ne.s32.totalorder %s413, %s414
      %p426 = scmp.eq.s32.totalorder %s38, 3
      %p427 = por %p425, %p426
      %p429 = scmp.ne.s32.totalorder %s414, %s428
      %p430 = scmp.eq.s32.totalorder %s38, 0
      %p431 = por %p429, %p430
      %s433 = sadd.s32 %s432, 1
      %p436 = scmp.eq.s32.totalorder %s32, 3
      %p437 = scmp.ne.s32.totalorder %s432, %s434
      %p438 = scmp.eq.s32.totalorder %s32, 0
      %p439 = por %p437, %p438
      %p440 = scmp.ne.s32.totalorder %s432, %s434
      %p441 = scmp.eq.s32.totalorder %s37, 3
      %p442 = por %p440, %p441
      %p443 = scmp.ne.s32.totalorder %s434, %s435
      %p444 = scmp.eq.s32.totalorder %s37, 0
      %p445 = por %p443, %p444
      %p446 = scmp.ne.s32.totalorder %s434, %s435
      %p447 = scmp.eq.s32.totalorder %s38, 3
      %p448 = por %p446, %p447
      %p450 = scmp.ne.s32.totalorder %s435, %s449
      %p451 = scmp.eq.s32.totalorder %s38, 0
      %p452 = por %p450, %p451
      %s453 = ssub.s32 %s39, %s51
      %p454 = scmp.eq.s32.totalorder %s453, 0
      %s456 = sadd.s32 %s455, 1
      %s457 = scalar_select %p454, %s455, %s456
      %p460 = pneg %p454
      %p461 = scmp.eq.s32.totalorder %s32, 3
      %p462 = por %p460, %p461
      %p463 = scmp.ne.s32.totalorder %s455, %s458
      %p464 = scmp.eq.s32.totalorder %s32, 0
      %p465 = por %p463, %p464
      %p466 = scmp.ne.s32.totalorder %s455, %s458
      %p467 = scmp.eq.s32.totalorder %s37, 3
      %p468 = por %p466, %p467
      %p469 = scmp.ne.s32.totalorder %s458, %s459
      %p470 = scmp.eq.s32.totalorder %s37, 0
      %p471 = por %p469, %p470
      %p472 = scmp.ne.s32.totalorder %s458, %s459
      %p473 = scmp.eq.s32.totalorder %s38, 3
      %p474 = por %p472, %p473
      %p476 = scmp.ne.s32.totalorder %s459, %s475
      %p477 = scmp.eq.s32.totalorder %s38, 0
      %p478 = por %p476, %p477
      %p479 = scmp.le.s32.totalorder 1, %s32
      %p480 = scmp.lt.s32.totalorder %s32, 5
      %p481 = pnand %p479, %p480
      %p482 = pneg %p481
      // Predicated region
      $region9: #{text_encoder_forward.1} parent=5 // pred_check
        _
      $region10: #{text_encoder_forward.1} parent=5 // pred_check_branch
        %484 = sbr.rel (%p481) target = $region12
      $region11: #{text_encoder_forward.1} parent=5 // pred_region
        %s485 = ssub.s32 %s32, 1
        // Predicated region
        $region13: #{text_encoder_forward.1} parent=11 // pred_check
          %p486 = pneg %p403
        $region14: #{text_encoder_forward.1} parent=11 // pred_check_branch
          %488 = sbr.rel (%p486) target = $region16
        $region15: #{text_encoder_forward.1} parent=11 // pred_region
          _
        $region16: #{text_encoder_forward.1} parent=11 // pred_fallthru
          _
        // Predicated region
        $region17: #{text_encoder_forward.1} parent=11 // pred_check
          %p489 = pneg %p424
        $region18: #{text_encoder_forward.1} parent=11 // pred_check_branch
          %491 = sbr.rel (%p489) target = $region20
        $region19: #{text_encoder_forward.1} parent=11 // pred_region
          _
        $region20: #{text_encoder_forward.1} parent=11 // pred_fallthru
          _
        // Predicated region
        $region21: #{text_encoder_forward.1} parent=11 // pred_check
          %p492 = pneg %p445
        $region22: #{text_encoder_forward.1} parent=11 // pred_check_branch
          %494 = sbr.rel (%p492) target = $region24
        $region23: #{text_encoder_forward.1} parent=11 // pred_region
          _
        $region24: #{text_encoder_forward.1} parent=11 // pred_fallthru
          _
      $region12: #{text_encoder_forward.1} parent=5 // pred_fallthru
        _
      %p495 = scmp.lt.s32.totalorder %s32, 4
      // Predicated region
      $region25: #{text_encoder_forward.1} parent=5 // pred_check
        %p496 = pneg %p495
      $region26: #{text_encoder_forward.1} parent=5 // pred_check_branch
        %498 = sbr.rel (%p496) target = $region28
      $region27: #{text_encoder_forward.1} parent=5 // pred_region
        // Predicated region
        $region29: #{text_encoder_forward.1} parent=27 // pred_check
          %p499 = pneg %p64
        $region30: #{text_encoder_forward.1} parent=27 // pred_check_branch
          %501 = sbr.rel (%p499) target = $region32
        $region31: #{text_encoder_forward.1} parent=27 // pred_region
          %p502 = scmp.lt.s32.totalorder %s39, 1
          %s503 = scalar_select %p502, %s39, 1
          %s504 = smul.addr %s503, 8
          %s505 = scalar_lea.vmem %s1, %s504
        $region32: #{text_encoder_forward.1} parent=27 // pred_fallthru
          _
        // Predicated region
        $region33: #{text_encoder_forward.1} parent=27 // pred_check
          %p506 = pneg %p90
        $region34: #{text_encoder_forward.1} parent=27 // pred_check_branch
          %508 = sbr.rel (%p506) target = $region36
        $region35: #{text_encoder_forward.1} parent=27 // pred_region
          %p509 = scmp.lt.s32.totalorder %s40, 1
          %s510 = scalar_select %p509, %s40, 1
          %s511 = scalar_lea.vmem %s2, %s510
        $region36: #{text_encoder_forward.1} parent=27 // pred_fallthru
          _
        // Predicated region
        $region37: #{text_encoder_forward.1} parent=27 // pred_check
          %p512 = pneg %p116
        $region38: #{text_encoder_forward.1} parent=27 // pred_check_branch
          %514 = sbr.rel (%p512) target = $region40
        $region39: #{text_encoder_forward.1} parent=27 // pred_region
          %p515 = scmp.lt.s32.totalorder %s40, 1
          %s516 = scalar_select %p515, %s40, 1
          %s517 = scalar_lea.vmem %s3, %s516
        $region40: #{text_encoder_forward.1} parent=27 // pred_fallthru
          _
        // Predicated region
        $region41: #{text_encoder_forward.1} parent=27 // pred_check
          %p518 = pneg %p142
        $region42: #{text_encoder_forward.1} parent=27 // pred_check_branch
          %520 = sbr.rel (%p518) target = $region44
        $region43: #{text_encoder_forward.1} parent=27 // pred_region
          %p521 = scmp.lt.s32.totalorder %s40, 1
          %s522 = scalar_select %p521, %s40, 1
          %s523 = smul.addr %s522, 4
          %s524 = smul.addr %s523, 8
          %s525 = scalar_lea.vmem %s4, %s524
        $region44: #{text_encoder_forward.1} parent=27 // pred_fallthru
          _
        // Predicated region
        $region45: #{text_encoder_forward.1} parent=27 // pred_check
          %p526 = pneg %p168
        $region46: #{text_encoder_forward.1} parent=27 // pred_check_branch
          %528 = sbr.rel (%p526) target = $region48
        $region47: #{text_encoder_forward.1} parent=27 // pred_region
          %p529 = scmp.lt.s32.totalorder %s40, 1
          %s530 = scalar_select %p529, %s40, 1
          %s531 = scalar_lea.vmem %s5, %s530
        $region48: #{text_encoder_forward.1} parent=27 // pred_fallthru
          _
        // Predicated region
        $region49: #{text_encoder_forward.1} parent=27 // pred_check
          %p532 = pneg %p194
        $region50: #{text_encoder_forward.1} parent=27 // pred_check_branch
          %534 = sbr.rel (%p532) target = $region52
        $region51: #{text_encoder_forward.1} parent=27 // pred_region
          %p535 = scmp.lt.s32.totalorder %s40, 1
          %s536 = scalar_select %p535, %s40, 1
          %s537 = smul.addr %s536, 4
          %s538 = smul.addr %s537, 8
          %s539 = scalar_lea.vmem %s6, %s538
        $region52: #{text_encoder_forward.1} parent=27 // pred_fallthru
          _
        // Predicated region
        $region53: #{text_encoder_forward.1} parent=27 // pred_check
          %p540 = pneg %p220
        $region54: #{text_encoder_forward.1} parent=27 // pred_check_branch
          %542 = sbr.rel (%p540) target = $region56
        $region55: #{text_encoder_forward.1} parent=27 // pred_region
          %p543 = scmp.lt.s32.totalorder %s40, 1
          %s544 = scalar_select %p543, %s40, 1
          %s545 = scalar_lea.vmem %s7, %s544
        $region56: #{text_encoder_forward.1} parent=27 // pred_fallthru
          _
        // Predicated region
        $region57: #{text_encoder_forward.1} parent=27 // pred_check
          %p546 = pneg %p246
        $region58: #{text_encoder_forward.1} parent=27 // pred_check_branch
          %548 = sbr.rel (%p546) target = $region60
        $region59: #{text_encoder_forward.1} parent=27 // pred_region
          %p549 = scmp.lt.s32.totalorder %s40, 1
          %s550 = scalar_select %p549, %s40, 1
          %s551 = scalar_lea.vmem %s8, %s550
        $region60: #{text_encoder_forward.1} parent=27 // pred_fallthru
          _
        // Predicated region
        $region61: #{text_encoder_forward.1} parent=27 // pred_check
          %p552 = pneg %p272
        $region62: #{text_encoder_forward.1} parent=27 // pred_check_branch
          %554 = sbr.rel (%p552) target = $region64
        $region63: #{text_encoder_forward.1} parent=27 // pred_region
          %p555 = scmp.lt.s32.totalorder %s40, 1
          %s556 = scalar_select %p555, %s40, 1
          %s557 = scalar_lea.vmem %s9, %s556
        $region64: #{text_encoder_forward.1} parent=27 // pred_fallthru
          _
        // Predicated region
        $region65: #{text_encoder_forward.1} parent=27 // pred_check
          %p558 = pneg %p298
        $region66: #{text_encoder_forward.1} parent=27 // pred_check_branch
          %560 = sbr.rel (%p558) target = $region68
        $region67: #{text_encoder_forward.1} parent=27 // pred_region
          %p561 = scmp.lt.s32.totalorder %s40, 1
          %s562 = scalar_select %p561, %s40, 1
          %s563 = smul.addr %s562, 4
          %s564 = smul.addr %s563, 8
          %s565 = scalar_lea.vmem %s10, %s564
        $region68: #{text_encoder_forward.1} parent=27 // pred_fallthru
          _
        // Predicated region
        $region69: #{text_encoder_forward.1} parent=27 // pred_check
          %p566 = pneg %p324
        $region70: #{text_encoder_forward.1} parent=27 // pred_check_branch
          %568 = sbr.rel (%p566) target = $region72
        $region71: #{text_encoder_forward.1} parent=27 // pred_region
          %p569 = scmp.lt.s32.totalorder %s40, 1
          %s570 = scalar_select %p569, %s40, 1
          %s571 = scalar_lea.vmem %s11, %s570
        $region72: #{text_encoder_forward.1} parent=27 // pred_fallthru
          _
        // Predicated region
        $region73: #{text_encoder_forward.1} parent=27 // pred_check
          %p572 = pneg %p350
        $region74: #{text_encoder_forward.1} parent=27 // pred_check_branch
          %574 = sbr.rel (%p572) target = $region76
        $region75: #{text_encoder_forward.1} parent=27 // pred_region
          %p575 = scmp.lt.s32.totalorder %s40, 1
          %s576 = scalar_select %p575, %s40, 1
          %s577 = smul.addr %s576, 16
          %s578 = smul.addr %s577, 8
          %s579 = scalar_lea.vmem %s12, %s578
        $region76: #{text_encoder_forward.1} parent=27 // pred_fallthru
          _
        // Predicated region
        $region77: #{text_encoder_forward.1} parent=27 // pred_check
          %p580 = pneg %p376
        $region78: #{text_encoder_forward.1} parent=27 // pred_check_branch
          %582 = sbr.rel (%p580) target = $region80
        $region79: #{text_encoder_forward.1} parent=27 // pred_region
          %p583 = scmp.lt.s32.totalorder %s40, 1
          %s584 = scalar_select %p583, %s40, 1
          %s585 = scalar_lea.vmem %s13, %s584
        $region80: #{text_encoder_forward.1} parent=27 // pred_fallthru
          _
      $region28: #{text_encoder_forward.1} parent=5 // pred_fallthru
        _
      %p586 = scmp.le.s32.totalorder 1, %s32
      %p587 = scmp.lt.s32.totalorder %s32, 5
      %p588 = pnand %p586, %p587
      %p589 = pneg %p588
      // Predicated region
      $region81: #{text_encoder_forward.1} parent=5 // pred_check
        _
      $region82: #{text_encoder_forward.1} parent=5 // pred_check_branch
        %591 = sbr.rel (%p588) target = $region84
      $region83: #{text_encoder_forward.1} parent=5 // pred_region
        %s592 = ssub.s32 %s32, 1
        %p593 = scmp.lt.s32.totalorder %s41, 1
        %s594 = scalar_select %p593, %s41, 1
        %s595 = smul.addr %s594, 8
        %s596 = scalar_lea.vmem %s1, %s595
        %p597 = pneg %p70
        %p598 = pneg %p67
        %p599 = scmp.lt.s32.totalorder %s42, 1
        %s600 = scalar_select %p599, %s42, 1
        %s601 = scalar_lea.vmem %s2, %s600
        %p602 = pneg %p96
        %p603 = pneg %p93
        %p604 = scmp.lt.s32.totalorder %s42, 1
        %s605 = scalar_select %p604, %s42, 1
        %s606 = scalar_lea.vmem %s3, %s605
        %p607 = pneg %p122
        %p608 = pneg %p119
        %p609 = scmp.lt.s32.totalorder %s42, 1
        %s610 = scalar_select %p609, %s42, 1
        %s611 = smul.addr %s610, 4
        %s612 = smul.addr %s611, 8
        %s613 = scalar_lea.vmem %s4, %s612
        %p614 = pneg %p148
        %p615 = pneg %p145
        %p616 = scmp.lt.s32.totalorder %s42, 1
        %s617 = scalar_select %p616, %s42, 1
        %s618 = scalar_lea.vmem %s5, %s617
        %p619 = pneg %p174
        %p620 = pneg %p171
        %p621 = scmp.lt.s32.totalorder %s42, 1
        %s622 = scalar_select %p621, %s42, 1
        %s623 = smul.addr %s622, 4
        %s624 = smul.addr %s623, 8
        %s625 = scalar_lea.vmem %s6, %s624
        %p626 = pneg %p200
        %p627 = pneg %p197
        %p628 = scmp.lt.s32.totalorder %s42, 1
        %s629 = scalar_select %p628, %s42, 1
        %s630 = scalar_lea.vmem %s7, %s629
        %p631 = pneg %p226
        %p632 = pneg %p223
        %p633 = scmp.lt.s32.totalorder %s42, 1
        %s634 = scalar_select %p633, %s42, 1
        %s635 = scalar_lea.vmem %s8, %s634
        %p636 = pneg %p252
        %p637 = pneg %p249
        %p638 = scmp.lt.s32.totalorder %s42, 1
        %s639 = scalar_select %p638, %s42, 1
        %s640 = scalar_lea.vmem %s9, %s639
        %p641 = pneg %p278
        %p642 = pneg %p275
        %p643 = scmp.lt.s32.totalorder %s42, 1
        %s644 = scalar_select %p643, %s42, 1
        %s645 = smul.addr %s644, 4
        %s646 = smul.addr %s645, 8
        %s647 = scalar_lea.vmem %s10, %s646
        %p648 = pneg %p304
        %p649 = pneg %p301
        %p650 = scmp.lt.s32.totalorder %s42, 1
        %s651 = scalar_select %p650, %s42, 1
        %s652 = scalar_lea.vmem %s11, %s651
        %p653 = pneg %p330
        %p654 = pneg %p327
        %p655 = scmp.lt.s32.totalorder %s42, 1
        %s656 = scalar_select %p655, %s42, 1
        %s657 = smul.addr %s656, 16
        %s658 = smul.addr %s657, 8
        %s659 = scalar_lea.vmem %s12, %s658
        %p660 = pneg %p356
        %p661 = pneg %p353
        %p662 = scmp.lt.s32.totalorder %s42, 1
        %s663 = scalar_select %p662, %s42, 1
        %s664 = scalar_lea.vmem %s13, %s663
        %p665 = pneg %p382
        %p666 = pneg %p379
        %p667 = pneg %p403
        %p668 = pneg %p400
        %p669 = pneg %p424
        %p670 = pneg %p421
        %p671 = pneg %p445
        %p672 = pneg %p442
        %p673 = pneg %p471
        %p674 = pneg %p468
        %s675 = sand.u32 %s458, 1
        %s676 = scalar_lea.sflag [#allocation6], %s675
        %s677 = sand.u32 %s458, 1
        %s678 = scalar_lea.vmem [#allocation5], %s677
        %p679 = scmp.lt.s32.totalorder %s41, 1
        %s680 = scalar_select %p679, %s41, 1
        %s681 = smul.addr %s680, 8
        %s682 = scalar_lea.vmem %s1, %s681
        %p683 = scmp.lt.s32.totalorder %s42, 1
        %s684 = scalar_select %p683, %s42, 1
        %s685 = scalar_lea.vmem %s2, %s684
        %p686 = scmp.lt.s32.totalorder %s42, 1
        %s687 = scalar_select %p686, %s42, 1
        %s688 = scalar_lea.vmem %s3, %s687
        %p689 = scmp.lt.s32.totalorder %s42, 1
        %s690 = scalar_select %p689, %s42, 1
        %s691 = smul.addr %s690, 4
        %s692 = smul.addr %s691, 8
        %s693 = scalar_lea.vmem %s4, %s692
        %p694 = scmp.lt.s32.totalorder %s42, 1
        %s695 = scalar_select %p694, %s42, 1
        %s696 = scalar_lea.vmem %s5, %s695
        %p697 = scmp.lt.s32.totalorder %s42, 1
        %s698 = scalar_select %p697, %s42, 1
        %s699 = smul.addr %s698, 4
        %s700 = smul.addr %s699, 8
        %s701 = scalar_lea.vmem %s6, %s700
        %p702 = scmp.lt.s32.totalorder %s42, 1
        %s703 = scalar_select %p702, %s42, 1
        %s704 = scalar_lea.vmem %s7, %s703
        %p705 = scmp.lt.s32.totalorder %s42, 1
        %s706 = scalar_select %p705, %s42, 1
        %s707 = scalar_lea.vmem %s8, %s706
        %p708 = scmp.lt.s32.totalorder %s42, 1
        %s709 = scalar_select %p708, %s42, 1
        %s710 = scalar_lea.vmem %s9, %s709
        %p711 = scmp.lt.s32.totalorder %s42, 1
        %s712 = scalar_select %p711, %s42, 1
        %s713 = smul.addr %s712, 4
        %s714 = smul.addr %s713, 8
        %s715 = scalar_lea.vmem %s10, %s714
        %p716 = scmp.lt.s32.totalorder %s42, 1
        %s717 = scalar_select %p716, %s42, 1
        %s718 = scalar_lea.vmem %s11, %s717
        %p719 = scmp.lt.s32.totalorder %s42, 1
        %s720 = scalar_select %p719, %s42, 1
        %s721 = smul.addr %s720, 16
        %s722 = smul.addr %s721, 8
        %s723 = scalar_lea.vmem %s12, %s722
        %p724 = scmp.lt.s32.totalorder %s42, 1
        %s725 = scalar_select %p724, %s42, 1
        %s726 = scalar_lea.vmem %s13, %s725
        %p727 = scmp.eq.s32.totalorder %s42, 0
        // Predicated region
        $region85: #{text_encoder_forward.1} parent=83 // pred_check
          %p728 = pneg %p727
        $region86: #{text_encoder_forward.1} parent=83 // pred_check_branch
          %730 = sbr.rel (%p728) target = $region88
        $region87: #{text_encoder_forward.1} parent=83 // pred_region
          %v731 = vld [vmem:[%s682] sm:$0xff]
          %vm732 = vcmask 261120
          %733 = vst.msk [vmem:[#allocation2] sm:$0xff] %vm732, %v731
        $region88: #{text_encoder_forward.1} parent=83 // pred_fallthru
          _
        %v734 = vld [vmem:[#allocation2] sm:$0xff]
        %v735 = vld [vmem:[%s685] sm:$0x1]
        %v736 = vld [vmem:[%s688] sm:$0x1]
        %vm737 = vcmask 261120
        %v738 = vsel %vm737, %v734, 0.0
        %739 = vadd.xlane.f32.xlu0 %v738
        %v740 = vpop.xlane.xlu0 %739
        %v741 = vrcp.pop 32.0
        %v742 = vmul.f32 %v740, %v741
        %v743 = vsub.f32 %v734, %v742
        %v744 = vmul.f32 %v743, %v743
        %v745 = vsel %vm737, %v744, 0.0
        %746 = vadd.xlane.f32.xlu0 %v745
        %v747 = vpop.xlane.xlu0 %746
        %v748 = vmul.f32 %v747, %v741
        %v749 = vadd.f32 %v748, 1e-05
        %v750 = vrsqrt.pop %v749
        %v751 = vmul.f32 %v743, %v750
        %v753 = vlaneseq
        %v754 = vshrl.u32 %v753, 7
        %v755 = vsub.s32 0, %v754
        %v756 = vrot.slane %v735, %v755
        %v758 = vmul.f32 %v751, %v756
        %v760 = vlaneseq
        %v761 = vshrl.u32 %v760, 7
        %v762 = vsub.s32 0, %v761
        %v763 = vrot.slane %v736, %v762
        %v765 = vadd.f32 %v758, %v763
        %v766 = vld [vmem:[%s693] sm:$0xff]
        %v767 = vld [vmem:[%s693 + $0x8] sm:$0xff]
        %v768 = vld [vmem:[%s693 + $0x10] sm:$0xff]
        %v769 = vld [vmem:[%s693 + $0x18] sm:$0xff]
        %v770 = vld [vmem:[%s696] sm:$0x1]
        %v772 = vlaneseq
        %v773 = vshrl.u32 %v772, 7
        %v774 = vsub.s32 0, %v773
        %v775 = vrot.slane %v770, %v774
        %v778 = vsel %vm737, %v765, 0
        %780 = vmatprep.subr.mxu0 0.0
        %781 = vmatpush1.msra.mxu0 %v766
        %782 = vmatprep.subr.mxu0 0.0
        %783 = vmatpush1.msra.mxu0 %v767
        %784 = vmatprep.subr.mxu0 0.0
        %785 = vmatpush1.msra.mxu0 %v768
        %786 = vmatprep.subr.mxu0 0.0
        %787 = vmatpush1.msra.mxu0 %v769
        %788 = vmatprep.subr.mxu0 0.0
        %789 = vmatpush1.msra.mxu0 0.0
        %790 = vmatprep.subr.mxu0 0.0
        %791 = vmatpush1.msra.mxu0 0.0
        %792 = vmatprep.subr.mxu0 0.0
        %793 = vmatpush1.msra.mxu0 0.0
        %794 = vmatprep.subr.mxu0 0.0
        %795 = vmatpush1.msra.mxu0 0.0
        %796 = vmatprep.subr.mxu0 0.0
        %797 = vmatpush1.msra.mxu0 0.0
        %798 = vmatprep.subr.mxu0 0.0
        %799 = vmatpush1.msra.mxu0 0.0
        %800 = vmatprep.subr.mxu0 0.0
        %801 = vmatpush1.msra.mxu0 0.0
        %802 = vmatprep.subr.mxu0 0.0
        %803 = vmatpush1.msra.mxu0 0.0
        %804 = vmatprep.subr.mxu0 0.0
        %805 = vmatpush1.msra.mxu0 0.0
        %806 = vmatprep.subr.mxu0 0.0
        %807 = vmatpush1.msra.mxu0 0.0
        %808 = vmatprep.subr.mxu0 0.0
        %809 = vmatpush1.msra.mxu0 0.0
        %810 = vmatprep.subr.mxu0 0.0
        %811 = vmatpush1.msra.mxu0 0.0
        %812 = vmatprep.subr.mxu0 0.0
        %813 = vmatpush1.msra.mxu0 0.0
        %814 = vmatprep.subr.mxu0 0.0
        %815 = vmatpush1.msra.mxu0 0.0
        %816 = vmatprep.subr.mxu0 0.0
        %817 = vmatpush1.msra.mxu0 0.0
        %818 = vmatprep.subr.mxu0 0.0
        %819 = vmatpush1.msra.mxu0 0.0
        %820 = vmatprep.subr.mxu0 0.0
        %821 = vmatpush1.msra.mxu0 0.0
        %822 = vmatprep.subr.mxu0 0.0
        %823 = vmatpush1.msra.mxu0 0.0
        %824 = vmatprep.subr.mxu0 0.0
        %825 = vmatpush1.msra.mxu0 0.0
        %826 = vmatprep.subr.mxu0 0.0
        %827 = vmatpush1.msra.mxu0 0.0
        %828 = vmatprep.subr.mxu0 0.0
        %829 = vmatpush1.msra.mxu0 0.0
        %830 = vmatprep.subr.mxu0 0.0
        %831 = vmatpush1.msra.mxu0 0.0
        %832 = vmatprep.subr.mxu0 0.0
        %833 = vmatpush1.msra.mxu0 0.0
        %834 = vmatprep.subr.mxu0 0.0
        %835 = vmatpush1.msra.mxu0 0.0
        %836 = vmatprep.subr.mxu0 0.0
        %837 = vmatpush1.msra.mxu0 0.0
        %838 = vmatprep.subr.mxu0 0.0
        %839 = vmatpush1.msra.mxu0 0.0
        %840 = vmatprep.subr.mxu0 0.0
        %841 = vmatpush1.msra.mxu0 0.0
        %842 = vmatprep.subr.mxu0 0.0
        %843 = vmatpush1.msra.mxu0 0.0
        %844 = vmatprep.mubr.f32.mxu0 0.0
        %845 = vmatmul.mubr.f32.gmra.mrb[0].mxu0 %v778
        %v846 = vpop.f32.mrb[0].mxu0
        %v847 = vadd.f32 %v775, %v846
        %v848 = vpop.f32.mrb[0].mxu0
        %849 = vdwg.mxu0
        %851 = vrot.lane.b32.xlu0 %v847, 120
        %v852 = vpop.permute.xlu0 %851
        %853 = vrot.lane.b32.xlu0 %v847, 112
        %v854 = vpop.permute.xlu0 %853
        %855 = vrot.lane.b32.xlu0 %v847, 104
        %v856 = vpop.permute.xlu0 %855
        %v857 = vlaneseq
        %v858 = vshrl.u32 %v857, 7
        %v859 = vlaneseq
        %v860 = vand.u32 %v859, 127
        %vm861 = vcmp.le.s32.totalorder %v860, %v858
        %v862 = vsel %vm861, 0.0, -1e+09
        %863 = vrot.lane.b32.xlu0 %v847, 96
        %v864 = vpop.permute.xlu0 %863
        %vm865 = vcmask 64512
        %v866 = vsel %vm865, %v847, 0
        %v868 = vsel %vm865, %v864, 0
        %870 = vmatprep.subr.mxu0 0.0
        %871 = vmatpush1.xpose.msra.mxu0 %v868
        %872 = vmatprep.subr.mxu0 0.0
        %873 = vmatpush1.xpose.msra.mxu0 0.0
        %874 = vmatprep.subr.mxu0 0.0
        %875 = vmatpush1.xpose.msra.mxu0 0.0
        %876 = vmatprep.subr.mxu0 0.0
        %877 = vmatpush1.xpose.msra.mxu0 0.0
        %878 = vmatprep.subr.mxu0 0.0
        %879 = vmatpush1.xpose.msra.mxu0 0.0
        %880 = vmatprep.subr.mxu0 0.0
        %881 = vmatpush1.xpose.msra.mxu0 0.0
        %882 = vmatprep.subr.mxu0 0.0
        %883 = vmatpush1.xpose.msra.mxu0 0.0
        %884 = vmatprep.subr.mxu0 0.0
        %885 = vmatpush1.xpose.msra.mxu0 0.0
        %886 = vmatprep.subr.mxu0 0.0
        %887 = vmatpush1.xpose.msra.mxu0 0.0
        %888 = vmatprep.subr.mxu0 0.0
        %889 = vmatpush1.xpose.msra.mxu0 0.0
        %890 = vmatprep.subr.mxu0 0.0
        %891 = vmatpush1.xpose.msra.mxu0 0.0
        %892 = vmatprep.subr.mxu0 0.0
        %893 = vmatpush1.xpose.msra.mxu0 0.0
        %894 = vmatprep.subr.mxu0 0.0
        %895 = vmatpush1.xpose.msra.mxu0 0.0
        %896 = vmatprep.subr.mxu0 0.0
        %897 = vmatpush1.xpose.msra.mxu0 0.0
        %898 = vmatprep.subr.mxu0 0.0
        %899 = vmatpush1.xpose.msra.mxu0 0.0
        %900 = vmatprep.subr.mxu0 0.0
        %901 = vmatpush1.xpose.msra.mxu0 0.0
        %902 = vmatprep.subr.mxu0 0.0
        %903 = vmatpush1.xpose.msra.mxu0 0.0
        %904 = vmatprep.subr.mxu0 0.0
        %905 = vmatpush1.xpose.msra.mxu0 0.0
        %906 = vmatprep.subr.mxu0 0.0
        %907 = vmatpush1.xpose.msra.mxu0 0.0
        %908 = vmatprep.subr.mxu0 0.0
        %909 = vmatpush1.xpose.msra.mxu0 0.0
        %910 = vmatprep.subr.mxu0 0.0
        %911 = vmatpush1.xpose.msra.mxu0 0.0
        %912 = vmatprep.subr.mxu0 0.0
        %913 = vmatpush1.xpose.msra.mxu0 0.0
        %914 = vmatprep.subr.mxu0 0.0
        %915 = vmatpush1.xpose.msra.mxu0 0.0
        %916 = vmatprep.subr.mxu0 0.0
        %917 = vmatpush1.xpose.msra.mxu0 0.0
        %918 = vmatprep.subr.mxu0 0.0
        %919 = vmatpush1.xpose.msra.mxu0 0.0
        %920 = vmatprep.subr.mxu0 0.0
        %921 = vmatpush1.xpose.msra.mxu0 0.0
        %922 = vmatprep.subr.mxu0 0.0
        %923 = vmatpush1.xpose.msra.mxu0 0.0
        %924 = vmatprep.subr.mxu0 0.0
        %925 = vmatpush1.xpose.msra.mxu0 0.0
        %926 = vmatprep.subr.mxu0 0.0
        %927 = vmatpush1.xpose.msra.mxu0 0.0
        %928 = vmatprep.subr.mxu0 0.0
        %929 = vmatpush1.xpose.msra.mxu0 0.0
        %930 = vmatprep.subr.mxu0 0.0
        %931 = vmatpush1.xpose.msra.mxu0 0.0
        %932 = vmatprep.subr.mxu0 0.0
        %933 = vmatpush1.xpose.msra.mxu0 0.0
        %934 = vmatprep.mubr.f32.mxu0 0.0
        %935 = vmatmul.mubr.f32.gmra.mrb[0].mxu0 %v866
        %v936 = vpop.f32.mrb[0].mxu0
        %v937 = vadd.f32 %v862, %v936
        %v938 = vpop.f32.mrb[0].mxu0
        %939 = vdwg.mxu0
        %940 = vrot.lane.b32.xlu0 %v852, 96
        %v941 = vpop.permute.xlu0 %940
        %v942 = vsel %vm865, %v852, 0
        %v944 = vsel %vm865, %v941, 0
        %946 = vmatprep.subr.mxu0 0.0
        %947 = vmatpush1.xpose.msra.mxu0 %v944
        %948 = vmatprep.subr.mxu0 0.0
        %949 = vmatpush1.xpose.msra.mxu0 0.0
        %950 = vmatprep.subr.mxu0 0.0
        %951 = vmatpush1.xpose.msra.mxu0 0.0
        %952 = vmatprep.subr.mxu0 0.0
        %953 = vmatpush1.xpose.msra.mxu0 0.0
        %954 = vmatprep.subr.mxu0 0.0
        %955 = vmatpush1.xpose.msra.mxu0 0.0
        %956 = vmatprep.subr.mxu0 0.0
        %957 = vmatpush1.xpose.msra.mxu0 0.0
        %958 = vmatprep.subr.mxu0 0.0
        %959 = vmatpush1.xpose.msra.mxu0 0.0
        %960 = vmatprep.subr.mxu0 0.0
        %961 = vmatpush1.xpose.msra.mxu0 0.0
        %962 = vmatprep.subr.mxu0 0.0
        %963 = vmatpush1.xpose.msra.mxu0 0.0
        %964 = vmatprep.subr.mxu0 0.0
        %965 = vmatpush1.xpose.msra.mxu0 0.0
        %966 = vmatprep.subr.mxu0 0.0
        %967 = vmatpush1.xpose.msra.mxu0 0.0
        %968 = vmatprep.subr.mxu0 0.0
        %969 = vmatpush1.xpose.msra.mxu0 0.0
        %970 = vmatprep.subr.mxu0 0.0
        %971 = vmatpush1.xpose.msra.mxu0 0.0
        %972 = vmatprep.subr.mxu0 0.0
        %973 = vmatpush1.xpose.msra.mxu0 0.0
        %974 = vmatprep.subr.mxu0 0.0
        %975 = vmatpush1.xpose.msra.mxu0 0.0
        %976 = vmatprep.subr.mxu0 0.0
        %977 = vmatpush1.xpose.msra.mxu0 0.0
        %978 = vmatprep.subr.mxu0 0.0
        %979 = vmatpush1.xpose.msra.mxu0 0.0
        %980 = vmatprep.subr.mxu0 0.0
        %981 = vmatpush1.xpose.msra.mxu0 0.0
        %982 = vmatprep.subr.mxu0 0.0
        %983 = vmatpush1.xpose.msra.mxu0 0.0
        %984 = vmatprep.subr.mxu0 0.0
        %985 = vmatpush1.xpose.msra.mxu0 0.0
        %986 = vmatprep.subr.mxu0 0.0
        %987 = vmatpush1.xpose.msra.mxu0 0.0
        %988 = vmatprep.subr.mxu0 0.0
        %989 = vmatpush1.xpose.msra.mxu0 0.0
        %990 = vmatprep.subr.mxu0 0.0
        %991 = vmatpush1.xpose.msra.mxu0 0.0
        %992 = vmatprep.subr.mxu0 0.0
        %993 = vmatpush1.xpose.msra.mxu0 0.0
        %994 = vmatprep.subr.mxu0 0.0
        %995 = vmatpush1.xpose.msra.mxu0 0.0
        %996 = vmatprep.subr.mxu0 0.0
        %997 = vmatpush1.xpose.msra.mxu0 0.0
        %998 = vmatprep.subr.mxu0 0.0
        %999 = vmatpush1.xpose.msra.mxu0 0.0
        %1000 = vmatprep.subr.mxu0 0.0
        %1001 = vmatpush1.xpose.msra.mxu0 0.0
        %1002 = vmatprep.subr.mxu0 0.0
        %1003 = vmatpush1.xpose.msra.mxu0 0.0
        %1004 = vmatprep.subr.mxu0 0.0
        %1005 = vmatpush1.xpose.msra.mxu0 0.0
        %1006 = vmatprep.subr.mxu0 0.0
        %1007 = vmatpush1.xpose.msra.mxu0 0.0
        %1008 = vmatprep.subr.mxu0 0.0
        %1009 = vmatpush1.xpose.msra.mxu0 0.0
        %1010 = vmatprep.mubr.f32.mxu0 0.0
        %1011 = vmatmul.mubr.f32.gmra.mrb[0].mxu0 %v942
        %v1012 = vpop.f32.mrb[0].mxu0
        %v1013 = vadd.f32 %v862, %v1012
        %v1014 = vpop.f32.mrb[0].mxu0
        %1015 = vdwg.mxu0
        %1016 = vrot.lane.b32.xlu0 %v854, 96
        %v1017 = vpop.permute.xlu0 %1016
        %v1018 = vsel %vm865, %v854, 0
        %v1020 = vsel %vm865, %v1017, 0
        %1022 = vmatprep.subr.mxu0 0.0
        %1023 = vmatpush1.xpose.msra.mxu0 %v1020
        %1024 = vmatprep.subr.mxu0 0.0
        %1025 = vmatpush1.xpose.msra.mxu0 0.0
        %1026 = vmatprep.subr.mxu0 0.0
        %1027 = vmatpush1.xpose.msra.mxu0 0.0
        %1028 = vmatprep.subr.mxu0 0.0
        %1029 = vmatpush1.xpose.msra.mxu0 0.0
        %1030 = vmatprep.subr.mxu0 0.0
        %1031 = vmatpush1.xpose.msra.mxu0 0.0
        %1032 = vmatprep.subr.mxu0 0.0
        %1033 = vmatpush1.xpose.msra.mxu0 0.0
        %1034 = vmatprep.subr.mxu0 0.0
        %1035 = vmatpush1.xpose.msra.mxu0 0.0
        %1036 = vmatprep.subr.mxu0 0.0
        %1037 = vmatpush1.xpose.msra.mxu0 0.0
        %1038 = vmatprep.subr.mxu0 0.0
        %1039 = vmatpush1.xpose.msra.mxu0 0.0
        %1040 = vmatprep.subr.mxu0 0.0
        %1041 = vmatpush1.xpose.msra.mxu0 0.0
        %1042 = vmatprep.subr.mxu0 0.0
        %1043 = vmatpush1.xpose.msra.mxu0 0.0
        %1044 = vmatprep.subr.mxu0 0.0
        %1045 = vmatpush1.xpose.msra.mxu0 0.0
        %1046 = vmatprep.subr.mxu0 0.0
        %1047 = vmatpush1.xpose.msra.mxu0 0.0
        %1048 = vmatprep.subr.mxu0 0.0
        %1049 = vmatpush1.xpose.msra.mxu0 0.0
        %1050 = vmatprep.subr.mxu0 0.0
        %1051 = vmatpush1.xpose.msra.mxu0 0.0
        %1052 = vmatprep.subr.mxu0 0.0
        %1053 = vmatpush1.xpose.msra.mxu0 0.0
        %1054 = vmatprep.subr.mxu0 0.0
        %1055 = vmatpush1.xpose.msra.mxu0 0.0
        %1056 = vmatprep.subr.mxu0 0.0
        %1057 = vmatpush1.xpose.msra.mxu0 0.0
        %1058 = vmatprep.subr.mxu0 0.0
        %1059 = vmatpush1.xpose.msra.mxu0 0.0
        %1060 = vmatprep.subr.mxu0 0.0
        %1061 = vmatpush1.xpose.msra.mxu0 0.0
        %1062 = vmatprep.subr.mxu0 0.0
        %1063 = vmatpush1.xpose.msra.mxu0 0.0
        %1064 = vmatprep.subr.mxu0 0.0
        %1065 = vmatpush1.xpose.msra.mxu0 0.0
        %1066 = vmatprep.subr.mxu0 0.0
        %1067 = vmatpush1.xpose.msra.mxu0 0.0
        %1068 = vmatprep.subr.mxu0 0.0
        %1069 = vmatpush1.xpose.msra.mxu0 0.0
        %1070 = vmatprep.subr.mxu0 0.0
        %1071 = vmatpush1.xpose.msra.mxu0 0.0
        %1072 = vmatprep.subr.mxu0 0.0
        %1073 = vmatpush1.xpose.msra.mxu0 0.0
        %1074 = vmatprep.subr.mxu0 0.0
        %1075 = vmatpush1.xpose.msra.mxu0 0.0
        %1076 = vmatprep.subr.mxu0 0.0
        %1077 = vmatpush1.xpose.msra.mxu0 0.0
        %1078 = vmatprep.subr.mxu0 0.0
        %1079 = vmatpush1.xpose.msra.mxu0 0.0
        %1080 = vmatprep.subr.mxu0 0.0
        %1081 = vmatpush1.xpose.msra.mxu0 0.0
        %1082 = vmatprep.subr.mxu0 0.0
        %1083 = vmatpush1.xpose.msra.mxu0 0.0
        %1084 = vmatprep.subr.mxu0 0.0
        %1085 = vmatpush1.xpose.msra.mxu0 0.0
        %1086 = vmatprep.mubr.f32.mxu0 0.0
        %1087 = vmatmul.mubr.f32.gmra.mrb[0].mxu0 %v1018
        %v1088 = vpop.f32.mrb[0].mxu0
        %v1089 = vadd.f32 %v862, %v1088
        %v1090 = vpop.f32.mrb[0].mxu0
        %1091 = vdwg.mxu0
        %1092 = vrot.lane.b32.xlu0 %v856, 96
        %v1093 = vpop.permute.xlu0 %1092
        %v1094 = vsel %vm865, %v856, 0
        %v1096 = vsel %vm865, %v1093, 0
        %1098 = vmatprep.subr.mxu0 0.0
        %1099 = vmatpush1.xpose.msra.mxu0 %v1096
        %1100 = vmatprep.subr.mxu0 0.0
        %1101 = vmatpush1.xpose.msra.mxu0 0.0
        %1102 = vmatprep.subr.mxu0 0.0
        %1103 = vmatpush1.xpose.msra.mxu0 0.0
        %1104 = vmatprep.subr.mxu0 0.0
        %1105 = vmatpush1.xpose.msra.mxu0 0.0
        %1106 = vmatprep.subr.mxu0 0.0
        %1107 = vmatpush1.xpose.msra.mxu0 0.0
        %1108 = vmatprep.subr.mxu0 0.0
        %1109 = vmatpush1.xpose.msra.mxu0 0.0
        %1110 = vmatprep.subr.mxu0 0.0
        %1111 = vmatpush1.xpose.msra.mxu0 0.0
        %1112 = vmatprep.subr.mxu0 0.0
        %1113 = vmatpush1.xpose.msra.mxu0 0.0
        %1114 = vmatprep.subr.mxu0 0.0
        %1115 = vmatpush1.xpose.msra.mxu0 0.0
        %1116 = vmatprep.subr.mxu0 0.0
        %1117 = vmatpush1.xpose.msra.mxu0 0.0
        %1118 = vmatprep.subr.mxu0 0.0
        %1119 = vmatpush1.xpose.msra.mxu0 0.0
        %1120 = vmatprep.subr.mxu0 0.0
        %1121 = vmatpush1.xpose.msra.mxu0 0.0
        %1122 = vmatprep.subr.mxu0 0.0
        %1123 = vmatpush1.xpose.msra.mxu0 0.0
        %1124 = vmatprep.subr.mxu0 0.0
        %1125 = vmatpush1.xpose.msra.mxu0 0.0
        %1126 = vmatprep.subr.mxu0 0.0
        %1127 = vmatpush1.xpose.msra.mxu0 0.0
        %1128 = vmatprep.subr.mxu0 0.0
        %1129 = vmatpush1.xpose.msra.mxu0 0.0
        %1130 = vmatprep.subr.mxu0 0.0
        %1131 = vmatpush1.xpose.msra.mxu0 0.0
        %1132 = vmatprep.subr.mxu0 0.0
        %1133 = vmatpush1.xpose.msra.mxu0 0.0
        %1134 = vmatprep.subr.mxu0 0.0
        %1135 = vmatpush1.xpose.msra.mxu0 0.0
        %1136 = vmatprep.subr.mxu0 0.0
        %1137 = vmatpush1.xpose.msra.mxu0 0.0
        %1138 = vmatprep.subr.mxu0 0.0
        %1139 = vmatpush1.xpose.msra.mxu0 0.0
        %1140 = vmatprep.subr.mxu0 0.0
        %1141 = vmatpush1.xpose.msra.mxu0 0.0
        %1142 = vmatprep.subr.mxu0 0.0
        %1143 = vmatpush1.xpose.msra.mxu0 0.0
        %1144 = vmatprep.subr.mxu0 0.0
        %1145 = vmatpush1.xpose.msra.mxu0 0.0
        %1146 = vmatprep.subr.mxu0 0.0
        %1147 = vmatpush1.xpose.msra.mxu0 0.0
        %1148 = vmatprep.subr.mxu0 0.0
        %1149 = vmatpush1.xpose.msra.mxu0 0.0
        %1150 = vmatprep.subr.mxu0 0.0
        %1151 = vmatpush1.xpose.msra.mxu0 0.0
        %1152 = vmatprep.subr.mxu0 0.0
        %1153 = vmatpush1.xpose.msra.mxu0 0.0
        %1154 = vmatprep.subr.mxu0 0.0
        %1155 = vmatpush1.xpose.msra.mxu0 0.0
        %1156 = vmatprep.subr.mxu0 0.0
        %1157 = vmatpush1.xpose.msra.mxu0 0.0
        %1158 = vmatprep.subr.mxu0 0.0
        %1159 = vmatpush1.xpose.msra.mxu0 0.0
        %1160 = vmatprep.subr.mxu0 0.0
        %1161 = vmatpush1.xpose.msra.mxu0 0.0
        %1162 = vmatprep.mubr.f32.mxu0 0.0
        %1163 = vmatmul.mubr.f32.gmra.mrb[0].mxu0 %v1094
        %v1164 = vpop.f32.mrb[0].mxu0
        %v1165 = vadd.f32 %v862, %v1164
        %v1166 = vpop.f32.mrb[0].mxu0
        %1167 = vdwg.mxu0
        %v1168 = vsel %vm865, %v937, -inf
        %1169 = vmax.xlane.f32.xlu0 %v1168
        %v1170 = vpop.xlane.xlu0 %1169
        %v1171 = vsel %vm865, %v1013, -inf
        %1172 = vmax.xlane.f32.xlu0 %v1171
        %v1173 = vpop.xlane.xlu0 %1172
        %v1174 = vsel %vm865, %v1089, -inf
        %1175 = vmax.xlane.f32.xlu0 %v1174
        %v1176 = vpop.xlane.xlu0 %1175
        %v1177 = vsel %vm865, %v1165, -inf
        %1178 = vmax.xlane.f32.xlu0 %v1177
        %v1179 = vpop.xlane.xlu0 %1178
        %v1180 = vsub.f32 %v937, %v1170
        %v1181 = vsub.f32 %v1013, %v1173
        %v1182 = vsub.f32 %v1089, %v1176
        %v1183 = vsub.f32 %v1165, %v1179
        %v1184 = vmul.f32 %v1180, 1.442695
        %v1185 = vpow.pop %v1184
        %v1186 = vmul.f32 %v1181, 1.442695
        %v1187 = vpow.pop %v1186
        %v1188 = vmul.f32 %v1182, 1.442695
        %v1189 = vpow.pop %v1188
        %v1190 = vmul.f32 %v1183, 1.442695
        %v1191 = vpow.pop %v1190
        %v1192 = vsel %vm865, %v1185, 0.0
        %1193 = vadd.xlane.f32.xlu0 %v1192
        %v1194 = vpop.xlane.xlu0 %1193
        %v1195 = vsel %vm865, %v1187, 0.0
        %1196 = vadd.xlane.f32.xlu0 %v1195
        %v1197 = vpop.xlane.xlu0 %1196
        %v1198 = vsel %vm865, %v1189, 0.0
        %1199 = vadd.xlane.f32.xlu0 %v1198
        %v1200 = vpop.xlane.xlu0 %1199
        %v1201 = vsel %vm865, %v1191, 0.0
        %1202 = vadd.xlane.f32.xlu0 %v1201
        %v1203 = vpop.xlane.xlu0 %1202
        %v1204 = vrcp.pop %v1194
        %v1205 = vrcp.pop %v1197
        %v1206 = vrcp.pop %v1200
        %v1207 = vrcp.pop %v1203
        %v1208 = vmul.f32 %v1185, %v1204
        %v1209 = vmul.f32 %v1187, %v1205
        %v1210 = vmul.f32 %v1189, %v1206
        %v1211 = vmul.f32 %v1191, %v1207
        %1212 = vrot.lane.b32.xlu0 %v847, 64
        %v1213 = vpop.permute.xlu0 %1212
        %v1216 = vsel %vm865, %v1208, 0
        %1218 = vmatprep.subr.mxu0 0.0
        %1219 = vmatpush1.msra.mxu0 %v1213
        %1220 = vmatprep.subr.mxu0 0.0
        %1221 = vmatpush1.msra.mxu0 0.0
        %1222 = vmatprep.subr.mxu0 0.0
        %1223 = vmatpush1.msra.mxu0 0.0
        %1224 = vmatprep.subr.mxu0 0.0
        %1225 = vmatpush1.msra.mxu0 0.0
        %1226 = vmatprep.subr.mxu0 0.0
        %1227 = vmatpush1.msra.mxu0 0.0
        %1228 = vmatprep.subr.mxu0 0.0
        %1229 = vmatpush1.msra.mxu0 0.0
        %1230 = vmatprep.subr.mxu0 0.0
        %1231 = vmatpush1.msra.mxu0 0.0
        %1232 = vmatprep.subr.mxu0 0.0
        %1233 = vmatpush1.msra.mxu0 0.0
        %1234 = vmatprep.subr.mxu0 0.0
        %1235 = vmatpush1.msra.mxu0 0.0
        %1236 = vmatprep.subr.mxu0 0.0
        %1237 = vmatpush1.msra.mxu0 0.0
        %1238 = vmatprep.subr.mxu0 0.0
        %1239 = vmatpush1.msra.mxu0 0.0
        %1240 = vmatprep.subr.mxu0 0.0
        %1241 = vmatpush1.msra.mxu0 0.0
        %1242 = vmatprep.subr.mxu0 0.0
        %1243 = vmatpush1.msra.mxu0 0.0
        %1244 = vmatprep.subr.mxu0 0.0
        %1245 = vmatpush1.msra.mxu0 0.0
        %1246 = vmatprep.subr.mxu0 0.0
        %1247 = vmatpush1.msra.mxu0 0.0
        %1248 = vmatprep.subr.mxu0 0.0
        %1249 = vmatpush1.msra.mxu0 0.0
        %1250 = vmatprep.subr.mxu0 0.0
        %1251 = vmatpush1.msra.mxu0 0.0
        %1252 = vmatprep.subr.mxu0 0.0
        %1253 = vmatpush1.msra.mxu0 0.0
        %1254 = vmatprep.subr.mxu0 0.0
        %1255 = vmatpush1.msra.mxu0 0.0
        %1256 = vmatprep.subr.mxu0 0.0
        %1257 = vmatpush1.msra.mxu0 0.0
        %1258 = vmatprep.subr.mxu0 0.0
        %1259 = vmatpush1.msra.mxu0 0.0
        %1260 = vmatprep.subr.mxu0 0.0
        %1261 = vmatpush1.msra.mxu0 0.0
        %1262 = vmatprep.subr.mxu0 0.0
        %1263 = vmatpush1.msra.mxu0 0.0
        %1264 = vmatprep.subr.mxu0 0.0
        %1265 = vmatpush1.msra.mxu0 0.0
        %1266 = vmatprep.subr.mxu0 0.0
        %1267 = vmatpush1.msra.mxu0 0.0
        %1268 = vmatprep.subr.mxu0 0.0
        %1269 = vmatpush1.msra.mxu0 0.0
        %1270 = vmatprep.subr.mxu0 0.0
        %1271 = vmatpush1.msra.mxu0 0.0
        %1272 = vmatprep.subr.mxu0 0.0
        %1273 = vmatpush1.msra.mxu0 0.0
        %1274 = vmatprep.subr.mxu0 0.0
        %1275 = vmatpush1.msra.mxu0 0.0
        %1276 = vmatprep.subr.mxu0 0.0
        %1277 = vmatpush1.msra.mxu0 0.0
        %1278 = vmatprep.subr.mxu0 0.0
        %1279 = vmatpush1.msra.mxu0 0.0
        %1280 = vmatprep.subr.mxu0 0.0
        %1281 = vmatpush1.msra.mxu0 0.0
        %1282 = vmatprep.mubr.f32.mxu0 0.0
        %1283 = vmatmul.mubr.f32.gmra.mrb[0].mxu0 %v1216
        %v1284 = vpop.f32.mrb[0].mxu0
        %v1285 = vadd.f32 0.0, %v1284
        %v1286 = vpop.f32.mrb[0].mxu0
        %1287 = vdwg.mxu0
        %1288 = vrot.lane.b32.xlu0 %v852, 64
        %v1289 = vpop.permute.xlu0 %1288
        %v1292 = vsel %vm865, %v1209, 0
        %1294 = vmatprep.subr.mxu0 0.0
        %1295 = vmatpush1.msra.mxu0 %v1289
        %1296 = vmatprep.subr.mxu0 0.0
        %1297 = vmatpush1.msra.mxu0 0.0
        %1298 = vmatprep.subr.mxu0 0.0
        %1299 = vmatpush1.msra.mxu0 0.0
        %1300 = vmatprep.subr.mxu0 0.0
        %1301 = vmatpush1.msra.mxu0 0.0
        %1302 = vmatprep.subr.mxu0 0.0
        %1303 = vmatpush1.msra.mxu0 0.0
        %1304 = vmatprep.subr.mxu0 0.0
        %1305 = vmatpush1.msra.mxu0 0.0
        %1306 = vmatprep.subr.mxu0 0.0
        %1307 = vmatpush1.msra.mxu0 0.0
        %1308 = vmatprep.subr.mxu0 0.0
        %1309 = vmatpush1.msra.mxu0 0.0
        %1310 = vmatprep.subr.mxu0 0.0
        %1311 = vmatpush1.msra.mxu0 0.0
        %1312 = vmatprep.subr.mxu0 0.0
        %1313 = vmatpush1.msra.mxu0 0.0
        %1314 = vmatprep.subr.mxu0 0.0
        %1315 = vmatpush1.msra.mxu0 0.0
        %1316 = vmatprep.subr.mxu0 0.0
        %1317 = vmatpush1.msra.mxu0 0.0
        %1318 = vmatprep.subr.mxu0 0.0
        %1319 = vmatpush1.msra.mxu0 0.0
        %1320 = vmatprep.subr.mxu0 0.0
        %1321 = vmatpush1.msra.mxu0 0.0
        %1322 = vmatprep.subr.mxu0 0.0
        %1323 = vmatpush1.msra.mxu0 0.0
        %1324 = vmatprep.subr.mxu0 0.0
        %1325 = vmatpush1.msra.mxu0 0.0
        %1326 = vmatprep.subr.mxu0 0.0
        %1327 = vmatpush1.msra.mxu0 0.0
        %1328 = vmatprep.subr.mxu0 0.0
        %1329 = vmatpush1.msra.mxu0 0.0
        %1330 = vmatprep.subr.mxu0 0.0
        %1331 = vmatpush1.msra.mxu0 0.0
        %1332 = vmatprep.subr.mxu0 0.0
        %1333 = vmatpush1.msra.mxu0 0.0
        %1334 = vmatprep.subr.mxu0 0.0
        %1335 = vmatpush1.msra.mxu0 0.0
        %1336 = vmatprep.subr.mxu0 0.0
        %1337 = vmatpush1.msra.mxu0 0.0
        %1338 = vmatprep.subr.mxu0 0.0
        %1339 = vmatpush1.msra.mxu0 0.0
        %1340 = vmatprep.subr.mxu0 0.0
        %1341 = vmatpush1.msra.mxu0 0.0
        %1342 = vmatprep.subr.mxu0 0.0
        %1343 = vmatpush1.msra.mxu0 0.0
        %1344 = vmatprep.subr.mxu0 0.0
        %1345 = vmatpush1.msra.mxu0 0.0
        %1346 = vmatprep.subr.mxu0 0.0
        %1347 = vmatpush1.msra.mxu0 0.0
        %1348 = vmatprep.subr.mxu0 0.0
        %1349 = vmatpush1.msra.mxu0 0.0
        %1350 = vmatprep.subr.mxu0 0.0
        %1351 = vmatpush1.msra.mxu0 0.0
        %1352 = vmatprep.subr.mxu0 0.0
        %1353 = vmatpush1.msra.mxu0 0.0
        %1354 = vmatprep.subr.mxu0 0.0
        %1355 = vmatpush1.msra.mxu0 0.0
        %1356 = vmatprep.subr.mxu0 0.0
        %1357 = vmatpush1.msra.mxu0 0.0
        %1358 = vmatprep.mubr.f32.mxu0 0.0
        %1359 = vmatmul.mubr.f32.gmra.mrb[0].mxu0 %v1292
        %v1360 = vpop.f32.mrb[0].mxu0
        %v1361 = vadd.f32 0.0, %v1360
        %v1362 = vpop.f32.mrb[0].mxu0
        %1363 = vdwg.mxu0
        %1364 = vrot.lane.b32.xlu0 %v854, 64
        %v1365 = vpop.permute.xlu0 %1364
        %v1368 = vsel %vm865, %v1210, 0
        %1370 = vmatprep.subr.mxu0 0.0
        %1371 = vmatpush1.msra.mxu0 %v1365
        %1372 = vmatprep.subr.mxu0 0.0
        %1373 = vmatpush1.msra.mxu0 0.0
        %1374 = vmatprep.subr.mxu0 0.0
        %1375 = vmatpush1.msra.mxu0 0.0
        %1376 = vmatprep.subr.mxu0 0.0
        %1377 = vmatpush1.msra.mxu0 0.0
        %1378 = vmatprep.subr.mxu0 0.0
        %1379 = vmatpush1.msra.mxu0 0.0
        %1380 = vmatprep.subr.mxu0 0.0
        %1381 = vmatpush1.msra.mxu0 0.0
        %1382 = vmatprep.subr.mxu0 0.0
        %1383 = vmatpush1.msra.mxu0 0.0
        %1384 = vmatprep.subr.mxu0 0.0
        %1385 = vmatpush1.msra.mxu0 0.0
        %1386 = vmatprep.subr.mxu0 0.0
        %1387 = vmatpush1.msra.mxu0 0.0
        %1388 = vmatprep.subr.mxu0 0.0
        %1389 = vmatpush1.msra.mxu0 0.0
        %1390 = vmatprep.subr.mxu0 0.0
        %1391 = vmatpush1.msra.mxu0 0.0
        %1392 = vmatprep.subr.mxu0 0.0
        %1393 = vmatpush1.msra.mxu0 0.0
        %1394 = vmatprep.subr.mxu0 0.0
        %1395 = vmatpush1.msra.mxu0 0.0
        %1396 = vmatprep.subr.mxu0 0.0
        %1397 = vmatpush1.msra.mxu0 0.0
        %1398 = vmatprep.subr.mxu0 0.0
        %1399 = vmatpush1.msra.mxu0 0.0
        %1400 = vmatprep.subr.mxu0 0.0
        %1401 = vmatpush1.msra.mxu0 0.0
        %1402 = vmatprep.subr.mxu0 0.0
        %1403 = vmatpush1.msra.mxu0 0.0
        %1404 = vmatprep.subr.mxu0 0.0
        %1405 = vmatpush1.msra.mxu0 0.0
        %1406 = vmatprep.subr.mxu0 0.0
        %1407 = vmatpush1.msra.mxu0 0.0
        %1408 = vmatprep.subr.mxu0 0.0
        %1409 = vmatpush1.msra.mxu0 0.0
        %1410 = vmatprep.subr.mxu0 0.0
        %1411 = vmatpush1.msra.mxu0 0.0
        %1412 = vmatprep.subr.mxu0 0.0
        %1413 = vmatpush1.msra.mxu0 0.0
        %1414 = vmatprep.subr.mxu0 0.0
        %1415 = vmatpush1.msra.mxu0 0.0
        %1416 = vmatprep.subr.mxu0 0.0
        %1417 = vmatpush1.msra.mxu0 0.0
        %1418 = vmatprep.subr.mxu0 0.0
        %1419 = vmatpush1.msra.mxu0 0.0
        %1420 = vmatprep.subr.mxu0 0.0
        %1421 = vmatpush1.msra.mxu0 0.0
        %1422 = vmatprep.subr.mxu0 0.0
        %1423 = vmatpush1.msra.mxu0 0.0
        %1424 = vmatprep.subr.mxu0 0.0
        %1425 = vmatpush1.msra.mxu0 0.0
        %1426 = vmatprep.subr.mxu0 0.0
        %1427 = vmatpush1.msra.mxu0 0.0
        %1428 = vmatprep.subr.mxu0 0.0
        %1429 = vmatpush1.msra.mxu0 0.0
        %1430 = vmatprep.subr.mxu0 0.0
        %1431 = vmatpush1.msra.mxu0 0.0
        %1432 = vmatprep.subr.mxu0 0.0
        %1433 = vmatpush1.msra.mxu0 0.0
        %1434 = vmatprep.mubr.f32.mxu0 0.0
        %1435 = vmatmul.mubr.f32.gmra.mrb[0].mxu0 %v1368
        %v1436 = vpop.f32.mrb[0].mxu0
        %v1437 = vadd.f32 0.0, %v1436
        %v1438 = vpop.f32.mrb[0].mxu0
        %1439 = vdwg.mxu0
        %1440 = vrot.lane.b32.xlu0 %v856, 64
        %v1441 = vpop.permute.xlu0 %1440
        %v1444 = vsel %vm865, %v1211, 0
        %1446 = vmatprep.subr.mxu0 0.0
        %1447 = vmatpush1.msra.mxu0 %v1441
        %1448 = vmatprep.subr.mxu0 0.0
        %1449 = vmatpush1.msra.mxu0 0.0
        %1450 = vmatprep.subr.mxu0 0.0
        %1451 = vmatpush1.msra.mxu0 0.0
        %1452 = vmatprep.subr.mxu0 0.0
        %1453 = vmatpush1.msra.mxu0 0.0
        %1454 = vmatprep.subr.mxu0 0.0
        %1455 = vmatpush1.msra.mxu0 0.0
        %1456 = vmatprep.subr.mxu0 0.0
        %1457 = vmatpush1.msra.mxu0 0.0
        %1458 = vmatprep.subr.mxu0 0.0
        %1459 = vmatpush1.msra.mxu0 0.0
        %1460 = vmatprep.subr.mxu0 0.0
        %1461 = vmatpush1.msra.mxu0 0.0
        %1462 = vmatprep.subr.mxu0 0.0
        %1463 = vmatpush1.msra.mxu0 0.0
        %1464 = vmatprep.subr.mxu0 0.0
        %1465 = vmatpush1.msra.mxu0 0.0
        %1466 = vmatprep.subr.mxu0 0.0
        %1467 = vmatpush1.msra.mxu0 0.0
        %1468 = vmatprep.subr.mxu0 0.0
        %1469 = vmatpush1.msra.mxu0 0.0
        %1470 = vmatprep.subr.mxu0 0.0
        %1471 = vmatpush1.msra.mxu0 0.0
        %1472 = vmatprep.subr.mxu0 0.0
        %1473 = vmatpush1.msra.mxu0 0.0
        %1474 = vmatprep.subr.mxu0 0.0
        %1475 = vmatpush1.msra.mxu0 0.0
        %1476 = vmatprep.subr.mxu0 0.0
        %1477 = vmatpush1.msra.mxu0 0.0
        %1478 = vmatprep.subr.mxu0 0.0
        %1479 = vmatpush1.msra.mxu0 0.0
        %1480 = vmatprep.subr.mxu0 0.0
        %1481 = vmatpush1.msra.mxu0 0.0
        %1482 = vmatprep.subr.mxu0 0.0
        %1483 = vmatpush1.msra.mxu0 0.0
        %1484 = vmatprep.subr.mxu0 0.0
        %1485 = vmatpush1.msra.mxu0 0.0
        %1486 = vmatprep.subr.mxu0 0.0
        %1487 = vmatpush1.msra.mxu0 0.0
        %1488 = vmatprep.subr.mxu0 0.0
        %1489 = vmatpush1.msra.mxu0 0.0
        %1490 = vmatprep.subr.mxu0 0.0
        %1491 = vmatpush1.msra.mxu0 0.0
        %1492 = vmatprep.subr.mxu0 0.0
        %1493 = vmatpush1.msra.mxu0 0.0
        %1494 = vmatprep.subr.mxu0 0.0
        %1495 = vmatpush1.msra.mxu0 0.0
        %1496 = vmatprep.subr.mxu0 0.0
        %1497 = vmatpush1.msra.mxu0 0.0
        %1498 = vmatprep.subr.mxu0 0.0
        %1499 = vmatpush1.msra.mxu0 0.0
        %1500 = vmatprep.subr.mxu0 0.0
        %1501 = vmatpush1.msra.mxu0 0.0
        %1502 = vmatprep.subr.mxu0 0.0
        %1503 = vmatpush1.msra.mxu0 0.0
        %1504 = vmatprep.subr.mxu0 0.0
        %1505 = vmatpush1.msra.mxu0 0.0
        %1506 = vmatprep.subr.mxu0 0.0
        %1507 = vmatpush1.msra.mxu0 0.0
        %1508 = vmatprep.subr.mxu0 0.0
        %1509 = vmatpush1.msra.mxu0 0.0
        %1510 = vmatprep.mubr.f32.mxu0 0.0
        %1511 = vmatmul.mubr.f32.gmra.mrb[0].mxu0 %v1444
        %v1512 = vpop.f32.mrb[0].mxu0
        %v1513 = vadd.f32 0.0, %v1512
        %v1514 = vpop.f32.mrb[0].mxu0
        %1515 = vdwg.mxu0
        %1517 = vrot.lane.b32.xlu0 %v1361, 8
        %v1518 = vpop.permute.xlu0 %1517
        %1521 = vrot.lane.b32.xlu0 %v1437, 16
        %v1522 = vpop.permute.xlu0 %1521
        %1525 = vrot.lane.b32.xlu0 %v1513, 24
        %v1526 = vpop.permute.xlu0 %1525
        %v1528 = vsel %vm865, %v1285, %v1518
        %vm1529 = vcmask 130048
        %v1530 = vsel %vm1529, %v1528, %v1522
        %vm1531 = vcmask 195584
        %v1532 = vsel %vm1531, %v1530, %v1526
        %v1533 = vld [vmem:[%s701] sm:$0xff]
        %v1534 = vld [vmem:[%s701 + $0x8] sm:$0xff]
        %v1535 = vld [vmem:[%s701 + $0x10] sm:$0xff]
        %v1536 = vld [vmem:[%s701 + $0x18] sm:$0xff]
        %v1537 = vld [vmem:[%s704] sm:$0x1]
        %v1539 = vlaneseq
        %v1540 = vshrl.u32 %v1539, 7
        %v1541 = vsub.s32 0, %v1540
        %v1542 = vrot.slane %v1537, %v1541
        %v1545 = vsel %vm737, %v1532, 0
        %1547 = vmatprep.subr.mxu0 0.0
        %1548 = vmatpush1.msra.mxu0 %v1533
        %1549 = vmatprep.subr.mxu0 0.0
        %1550 = vmatpush1.msra.mxu0 %v1534
        %1551 = vmatprep.subr.mxu0 0.0
        %1552 = vmatpush1.msra.mxu0 %v1535
        %1553 = vmatprep.subr.mxu0 0.0
        %1554 = vmatpush1.msra.mxu0 %v1536
        %1555 = vmatprep.subr.mxu0 0.0
        %1556 = vmatpush1.msra.mxu0 0.0
        %1557 = vmatprep.subr.mxu0 0.0
        %1558 = vmatpush1.msra.mxu0 0.0
        %1559 = vmatprep.subr.mxu0 0.0
        %1560 = vmatpush1.msra.mxu0 0.0
        %1561 = vmatprep.subr.mxu0 0.0
        %1562 = vmatpush1.msra.mxu0 0.0
        %1563 = vmatprep.subr.mxu0 0.0
        %1564 = vmatpush1.msra.mxu0 0.0
        %1565 = vmatprep.subr.mxu0 0.0
        %1566 = vmatpush1.msra.mxu0 0.0
        %1567 = vmatprep.subr.mxu0 0.0
        %1568 = vmatpush1.msra.mxu0 0.0
        %1569 = vmatprep.subr.mxu0 0.0
        %1570 = vmatpush1.msra.mxu0 0.0
        %1571 = vmatprep.subr.mxu0 0.0
        %1572 = vmatpush1.msra.mxu0 0.0
        %1573 = vmatprep.subr.mxu0 0.0
        %1574 = vmatpush1.msra.mxu0 0.0
        %1575 = vmatprep.subr.mxu0 0.0
        %1576 = vmatpush1.msra.mxu0 0.0
        %1577 = vmatprep.subr.mxu0 0.0
        %1578 = vmatpush1.msra.mxu0 0.0
        %1579 = vmatprep.subr.mxu0 0.0
        %1580 = vmatpush1.msra.mxu0 0.0
        %1581 = vmatprep.subr.mxu0 0.0
        %1582 = vmatpush1.msra.mxu0 0.0
        %1583 = vmatprep.subr.mxu0 0.0
        %1584 = vmatpush1.msra.mxu0 0.0
        %1585 = vmatprep.subr.mxu0 0.0
        %1586 = vmatpush1.msra.mxu0 0.0
        %1587 = vmatprep.subr.mxu0 0.0
        %1588 = vmatpush1.msra.mxu0 0.0
        %1589 = vmatprep.subr.mxu0 0.0
        %1590 = vmatpush1.msra.mxu0 0.0
        %1591 = vmatprep.subr.mxu0 0.0
        %1592 = vmatpush1.msra.mxu0 0.0
        %1593 = vmatprep.subr.mxu0 0.0
        %1594 = vmatpush1.msra.mxu0 0.0
        %1595 = vmatprep.subr.mxu0 0.0
        %1596 = vmatpush1.msra.mxu0 0.0
        %1597 = vmatprep.subr.mxu0 0.0
        %1598 = vmatpush1.msra.mxu0 0.0
        %1599 = vmatprep.subr.mxu0 0.0
        %1600 = vmatpush1.msra.mxu0 0.0
        %1601 = vmatprep.subr.mxu0 0.0
        %1602 = vmatpush1.msra.mxu0 0.0
        %1603 = vmatprep.subr.mxu0 0.0
        %1604 = vmatpush1.msra.mxu0 0.0
        %1605 = vmatprep.subr.mxu0 0.0
        %1606 = vmatpush1.msra.mxu0 0.0
        %1607 = vmatprep.subr.mxu0 0.0
        %1608 = vmatpush1.msra.mxu0 0.0
        %1609 = vmatprep.subr.mxu0 0.0
        %1610 = vmatpush1.msra.mxu0 0.0
        %1611 = vmatprep.mubr.f32.mxu0 0.0
        %1612 = vmatmul.mubr.f32.gmra.mrb[0].mxu0 %v1545
        %v1613 = vpop.f32.mrb[0].mxu0
        %v1614 = vadd.f32 %v1542, %v1613
        %v1615 = vpop.f32.mrb[0].mxu0
        %1616 = vdwg.mxu0
        %v1617 = vadd.f32 %v734, %v1614
        %v1618 = vld [vmem:[%s707] sm:$0x1]
        %v1619 = vld [vmem:[%s710] sm:$0x1]
        %v1620 = vsel %vm737, %v1617, 0.0
        %1621 = vadd.xlane.f32.xlu0 %v1620
        %v1622 = vpop.xlane.xlu0 %1621
        %v1623 = vmul.f32 %v1622, %v741
        %v1624 = vsub.f32 %v1617, %v1623
        %v1625 = vmul.f32 %v1624, %v1624
        %v1626 = vsel %vm737, %v1625, 0.0
        %1627 = vadd.xlane.f32.xlu0 %v1626
        %v1628 = vpop.xlane.xlu0 %1627
        %v1629 = vmul.f32 %v1628, %v741
        %v1630 = vadd.f32 %v1629, 1e-05
        %v1631 = vrsqrt.pop %v1630
        %v1632 = vmul.f32 %v1624, %v1631
        %v1634 = vlaneseq
        %v1635 = vshrl.u32 %v1634, 7
        %v1636 = vsub.s32 0, %v1635
        %v1637 = vrot.slane %v1618, %v1636
        %v1639 = vmul.f32 %v1632, %v1637
        %v1641 = vlaneseq
        %v1642 = vshrl.u32 %v1641, 7
        %v1643 = vsub.s32 0, %v1642
        %v1644 = vrot.slane %v1619, %v1643
        %v1646 = vadd.f32 %v1639, %v1644
        %v1647 = vld [vmem:[%s715] sm:$0xff]
        %v1648 = vld [vmem:[%s715 + $0x8] sm:$0xff]
        %v1649 = vld [vmem:[%s715 + $0x10] sm:$0xff]
        %v1650 = vld [vmem:[%s715 + $0x18] sm:$0xff]
        %v1651 = vld [vmem:[%s718] sm:$0x1]
        %v1653 = vlaneseq
        %v1654 = vshrl.u32 %v1653, 7
        %v1655 = vsub.s32 0, %v1654
        %v1656 = vrot.slane %v1651, %v1655
        %v1659 = vsel %vm737, %v1646, 0
        %1661 = vmatprep.subr.mxu0 0.0
        %1662 = vmatpush1.msra.mxu0 %v1647
        %1663 = vmatprep.subr.mxu0 0.0
        %1664 = vmatpush1.msra.mxu0 %v1648
        %1665 = vmatprep.subr.mxu0 0.0
        %1666 = vmatpush1.msra.mxu0 %v1649
        %1667 = vmatprep.subr.mxu0 0.0
        %1668 = vmatpush1.msra.mxu0 %v1650
        %1669 = vmatprep.subr.mxu0 0.0
        %1670 = vmatpush1.msra.mxu0 0.0
        %1671 = vmatprep.subr.mxu0 0.0
        %1672 = vmatpush1.msra.mxu0 0.0
        %1673 = vmatprep.subr.mxu0 0.0
        %1674 = vmatpush1.msra.mxu0 0.0
        %1675 = vmatprep.subr.mxu0 0.0
        %1676 = vmatpush1.msra.mxu0 0.0
        %1677 = vmatprep.subr.mxu0 0.0
        %1678 = vmatpush1.msra.mxu0 0.0
        %1679 = vmatprep.subr.mxu0 0.0
        %1680 = vmatpush1.msra.mxu0 0.0
        %1681 = vmatprep.subr.mxu0 0.0
        %1682 = vmatpush1.msra.mxu0 0.0
        %1683 = vmatprep.subr.mxu0 0.0
        %1684 = vmatpush1.msra.mxu0 0.0
        %1685 = vmatprep.subr.mxu0 0.0
        %1686 = vmatpush1.msra.mxu0 0.0
        %1687 = vmatprep.subr.mxu0 0.0
        %1688 = vmatpush1.msra.mxu0 0.0
        %1689 = vmatprep.subr.mxu0 0.0
        %1690 = vmatpush1.msra.mxu0 0.0
        %1691 = vmatprep.subr.mxu0 0.0
        %1692 = vmatpush1.msra.mxu0 0.0
        %1693 = vmatprep.subr.mxu0 0.0
        %1694 = vmatpush1.msra.mxu0 0.0
        %1695 = vmatprep.subr.mxu0 0.0
        %1696 = vmatpush1.msra.mxu0 0.0
        %1697 = vmatprep.subr.mxu0 0.0
        %1698 = vmatpush1.msra.mxu0 0.0
        %1699 = vmatprep.subr.mxu0 0.0
        %1700 = vmatpush1.msra.mxu0 0.0
        %1701 = vmatprep.subr.mxu0 0.0
        %1702 = vmatpush1.msra.mxu0 0.0
        %1703 = vmatprep.subr.mxu0 0.0
        %1704 = vmatpush1.msra.mxu0 0.0
        %1705 = vmatprep.subr.mxu0 0.0
        %1706 = vmatpush1.msra.mxu0 0.0
        %1707 = vmatprep.subr.mxu0 0.0
        %1708 = vmatpush1.msra.mxu0 0.0
        %1709 = vmatprep.subr.mxu0 0.0
        %1710 = vmatpush1.msra.mxu0 0.0
        %1711 = vmatprep.subr.mxu0 0.0
        %1712 = vmatpush1.msra.mxu0 0.0
        %1713 = vmatprep.subr.mxu0 0.0
        %1714 = vmatpush1.msra.mxu0 0.0
        %1715 = vmatprep.subr.mxu0 0.0
        %1716 = vmatpush1.msra.mxu0 0.0
        %1717 = vmatprep.subr.mxu0 0.0
        %1718 = vmatpush1.msra.mxu0 0.0
        %1719 = vmatprep.subr.mxu0 0.0
        %1720 = vmatpush1.msra.mxu0 0.0
        %1721 = vmatprep.subr.mxu0 0.0
        %1722 = vmatpush1.msra.mxu0 0.0
        %1723 = vmatprep.subr.mxu0 0.0
        %1724 = vmatpush1.msra.mxu0 0.0
        %1725 = vmatprep.mubr.f32.mxu0 0.0
        %1726 = vmatmul.mubr.f32.gmra.mrb[0].mxu0 %v1659
        %v1727 = vpop.f32.mrb[0].mxu0
        %v1728 = vadd.f32 %v1656, %v1727
        %v1729 = vpop.f32.mrb[0].mxu0
        %1730 = vdwg.mxu0
        %v1731 = vmul.f32 %v1728, 1.702
        %v1732 = vxor.u32 %v1731, 2147483648
        %v1733 = vmul.f32 %v1732, 1.442695
        %v1734 = vpow.pop %v1733
        %v1735 = vadd.f32 %v1734, 1.0
        %v1736 = vrcp.pop %v1735
        %v1737 = vmul.f32 1.0, %v1736
        %v1738 = vmul.f32 %v1728, %v1737
        %v1739 = vld [vmem:[%s723] sm:$0xff]
        %v1740 = vld [vmem:[%s723 + $0x8] sm:$0xff]
        %v1741 = vld [vmem:[%s723 + $0x10] sm:$0xff]
        %v1742 = vld [vmem:[%s723 + $0x18] sm:$0xff]
        %v1743 = vld [vmem:[%s723 + $0x20] sm:$0xff]
        %v1744 = vld [vmem:[%s723 + $0x28] sm:$0xff]
        %v1745 = vld [vmem:[%s723 + $0x30] sm:$0xff]
        %v1746 = vld [vmem:[%s723 + $0x38] sm:$0xff]
        %v1747 = vld [vmem:[%s723 + $0x40] sm:$0xff]
        %v1748 = vld [vmem:[%s723 + $0x48] sm:$0xff]
        %v1749 = vld [vmem:[%s723 + $0x50] sm:$0xff]
        %v1750 = vld [vmem:[%s723 + $0x58] sm:$0xff]
        %v1751 = vld [vmem:[%s723 + $0x60] sm:$0xff]
        %v1752 = vld [vmem:[%s723 + $0x68] sm:$0xff]
        %v1753 = vld [vmem:[%s723 + $0x70] sm:$0xff]
        %v1754 = vld [vmem:[%s723 + $0x78] sm:$0xff]
        %v1755 = vld [vmem:[%s726] sm:$0x1]
        %v1757 = vlaneseq
        %v1758 = vshrl.u32 %v1757, 7
        %v1759 = vsub.s32 0, %v1758
        %v1760 = vrot.slane %v1755, %v1759
        %1762 = vmatprep.subr.mxu0 0.0
        %1763 = vmatpush1.msra.mxu0 %v1739
        %1764 = vmatprep.subr.mxu0 0.0
        %1765 = vmatpush1.msra.mxu0 %v1740
        %1766 = vmatprep.subr.mxu0 0.0
        %1767 = vmatpush1.msra.mxu0 %v1741
        %1768 = vmatprep.subr.mxu0 0.0
        %1769 = vmatpush1.msra.mxu0 %v1742
        %1770 = vmatprep.subr.mxu0 0.0
        %1771 = vmatpush1.msra.mxu0 %v1743
        %1772 = vmatprep.subr.mxu0 0.0
        %1773 = vmatpush1.msra.mxu0 %v1744
        %1774 = vmatprep.subr.mxu0 0.0
        %1775 = vmatpush1.msra.mxu0 %v1745
        %1776 = vmatprep.subr.mxu0 0.0
        %1777 = vmatpush1.msra.mxu0 %v1746
        %1778 = vmatprep.subr.mxu0 0.0
        %1779 = vmatpush1.msra.mxu0 %v1747
        %1780 = vmatprep.subr.mxu0 0.0
        %1781 = vmatpush1.msra.mxu0 %v1748
        %1782 = vmatprep.subr.mxu0 0.0
        %1783 = vmatpush1.msra.mxu0 %v1749
        %1784 = vmatprep.subr.mxu0 0.0
        %1785 = vmatpush1.msra.mxu0 %v1750
        %1786 = vmatprep.subr.mxu0 0.0
        %1787 = vmatpush1.msra.mxu0 %v1751
        %1788 = vmatprep.subr.mxu0 0.0
        %1789 = vmatpush1.msra.mxu0 %v1752
        %1790 = vmatprep.subr.mxu0 0.0
        %1791 = vmatpush1.msra.mxu0 %v1753
        %1792 = vmatprep.subr.mxu0 0.0
        %1793 = vmatpush1.msra.mxu0 %v1754
        %1794 = vmatprep.subr.mxu0 0.0
        %1795 = vmatpush1.msra.mxu0 0.0
        %1796 = vmatprep.subr.mxu0 0.0
        %1797 = vmatpush1.msra.mxu0 0.0
        %1798 = vmatprep.subr.mxu0 0.0
        %1799 = vmatpush1.msra.mxu0 0.0
        %1800 = vmatprep.subr.mxu0 0.0
        %1801 = vmatpush1.msra.mxu0 0.0
        %1802 = vmatprep.subr.mxu0 0.0
        %1803 = vmatpush1.msra.mxu0 0.0
        %1804 = vmatprep.subr.mxu0 0.0
        %1805 = vmatpush1.msra.mxu0 0.0
        %1806 = vmatprep.subr.mxu0 0.0
        %1807 = vmatpush1.msra.mxu0 0.0
        %1808 = vmatprep.subr.mxu0 0.0
        %1809 = vmatpush1.msra.mxu0 0.0
        %1810 = vmatprep.subr.mxu0 0.0
        %1811 = vmatpush1.msra.mxu0 0.0
        %1812 = vmatprep.subr.mxu0 0.0
        %1813 = vmatpush1.msra.mxu0 0.0
        %1814 = vmatprep.subr.mxu0 0.0
        %1815 = vmatpush1.msra.mxu0 0.0
        %1816 = vmatprep.subr.mxu0 0.0
        %1817 = vmatpush1.msra.mxu0 0.0
        %1818 = vmatprep.subr.mxu0 0.0
        %1819 = vmatpush1.msra.mxu0 0.0
        %1820 = vmatprep.subr.mxu0 0.0
        %1821 = vmatpush1.msra.mxu0 0.0
        %1822 = vmatprep.subr.mxu0 0.0
        %1823 = vmatpush1.msra.mxu0 0.0
        %1824 = vmatprep.subr.mxu0 0.0
        %1825 = vmatpush1.msra.mxu0 0.0
        %1826 = vmatprep.mubr.f32.mxu0 0.0
        %1827 = vmatmul.mubr.f32.gmra.mrb[0].mxu0 %v1738
        %v1828 = vpop.f32.mrb[0].mxu0
        %v1829 = vadd.f32 %v1760, %v1828
        %v1830 = vpop.f32.mrb[0].mxu0
        %1831 = vdwg.mxu0
        %v1832 = vadd.f32 %v1617, %v1829
        %1833 = vst.msk [vmem:[#allocation2] sm:$0xff] %vm737, %v1832
        %p1834 = scmp.eq.s32.totalorder %s42, 1
        // Predicated region
        $region89: #{text_encoder_forward.1} parent=83 // pred_check
          %p1835 = pneg %p1834
        $region90: #{text_encoder_forward.1} parent=83 // pred_check_branch
          %1837 = sbr.rel (%p1835) target = $region92
        $region91: #{text_encoder_forward.1} parent=83 // pred_region
          %s1838 = sld [smem:[#allocation4 + %s41]]
          %v1839 = vstv %s1838
          %vm1840 = vcmp.eq.s32.totalorder %v858, %v1839
          %v1841 = vsel %vm1840, 1, 0
          %v1842 = vcvt.s32.f32 %v1841
          %v1843 = vmul.f32 %v1832, %v1842
          %v1844 = vsel %vm737, %v1843, 0.0
          %v1845 = vrot.slane %v1844, 4
          %v1846 = vadd.f32 %v1844, %v1845
          %v1847 = vrot.slane %v1846, 2
          %v1848 = vadd.f32 %v1846, %v1847
          %v1849 = vrot.slane %v1848, 1
          %v1850 = vadd.f32 %v1848, %v1849
          %v1851 = vld [vmem:[%s14] sm:$0x1]
          %v1852 = vld [vmem:[%s15] sm:$0x1]
          %v1853 = vsel %vm737, %v1850, 0.0
          %1854 = vadd.xlane.f32.xlu0 %v1853
          %v1855 = vpop.xlane.xlu0 %1854
          %v1856 = vmul.f32 %v1855, %v741
          %v1857 = vsub.f32 %v1850, %v1856
          %v1858 = vmul.f32 %v1857, %v1857
          %v1859 = vsel %vm737, %v1858, 0.0
          %1860 = vadd.xlane.f32.xlu0 %v1859
          %v1861 = vpop.xlane.xlu0 %1860
          %v1862 = vmul.f32 %v1861, %v741
          %v1863 = vadd.f32 %v1862, 1e-05
          %v1864 = vrsqrt.pop %v1863
          %v1865 = vmul.f32 %v1857, %v1864
          %v1866 = vmul.f32 %v1865, %v1851
          %v1867 = vadd.f32 %v1866, %v1852
          %v1868 = vld [vmem:[%s16] sm:$0xff]
          %v1869 = vld [vmem:[%s16 + $0x8] sm:$0xff]
          %v1870 = vld [vmem:[%s16 + $0x10] sm:$0xff]
          %v1871 = vld [vmem:[%s16 + $0x18] sm:$0xff]
          %v1873 = vsel %vm737, %v1867, 0
          %1875 = vmatprep.subr.mxu0 0.0
          %1876 = vmatpush1.msra.mxu0 %v1868
          %1877 = vmatprep.subr.mxu0 0.0
          %1878 = vmatpush1.msra.mxu0 %v1869
          %1879 = vmatprep.subr.mxu0 0.0
          %1880 = vmatpush1.msra.mxu0 %v1870
          %1881 = vmatprep.subr.mxu0 0.0
          %1882 = vmatpush1.msra.mxu0 %v1871
          %1883 = vmatprep.subr.mxu0 0.0
          %1884 = vmatpush1.msra.mxu0 0.0
          %1885 = vmatprep.subr.mxu0 0.0
          %1886 = vmatpush1.msra.mxu0 0.0
          %1887 = vmatprep.subr.mxu0 0.0
          %1888 = vmatpush1.msra.mxu0 0.0
          %1889 = vmatprep.subr.mxu0 0.0
          %1890 = vmatpush1.msra.mxu0 0.0
          %1891 = vmatprep.subr.mxu0 0.0
          %1892 = vmatpush1.msra.mxu0 0.0
          %1893 = vmatprep.subr.mxu0 0.0
          %1894 = vmatpush1.msra.mxu0 0.0
          %1895 = vmatprep.subr.mxu0 0.0
          %1896 = vmatpush1.msra.mxu0 0.0
          %1897 = vmatprep.subr.mxu0 0.0
          %1898 = vmatpush1.msra.mxu0 0.0
          %1899 = vmatprep.subr.mxu0 0.0
          %1900 = vmatpush1.msra.mxu0 0.0
          %1901 = vmatprep.subr.mxu0 0.0
          %1902 = vmatpush1.msra.mxu0 0.0
          %1903 = vmatprep.subr.mxu0 0.0
          %1904 = vmatpush1.msra.mxu0 0.0
          %1905 = vmatprep.subr.mxu0 0.0
          %1906 = vmatpush1.msra.mxu0 0.0
          %1907 = vmatprep.subr.mxu0 0.0
          %1908 = vmatpush1.msra.mxu0 0.0
          %1909 = vmatprep.subr.mxu0 0.0
          %1910 = vmatpush1.msra.mxu0 0.0
          %1911 = vmatprep.subr.mxu0 0.0
          %1912 = vmatpush1.msra.mxu0 0.0
          %1913 = vmatprep.subr.mxu0 0.0
          %1914 = vmatpush1.msra.mxu0 0.0
          %1915 = vmatprep.subr.mxu0 0.0
          %1916 = vmatpush1.msra.mxu0 0.0
          %1917 = vmatprep.subr.mxu0 0.0
          %1918 = vmatpush1.msra.mxu0 0.0
          %1919 = vmatprep.subr.mxu0 0.0
          %1920 = vmatpush1.msra.mxu0 0.0
          %1921 = vmatprep.subr.mxu0 0.0
          %1922 = vmatpush1.msra.mxu0 0.0
          %1923 = vmatprep.subr.mxu0 0.0
          %1924 = vmatpush1.msra.mxu0 0.0
          %1925 = vmatprep.subr.mxu0 0.0
          %1926 = vmatpush1.msra.mxu0 0.0
          %1927 = vmatprep.subr.mxu0 0.0
          %1928 = vmatpush1.msra.mxu0 0.0
          %1929 = vmatprep.subr.mxu0 0.0
          %1930 = vmatpush1.msra.mxu0 0.0
          %1931 = vmatprep.subr.mxu0 0.0
          %1932 = vmatpush1.msra.mxu0 0.0
          %1933 = vmatprep.subr.mxu0 0.0
          %1934 = vmatpush1.msra.mxu0 0.0
          %1935 = vmatprep.subr.mxu0 0.0
          %1936 = vmatpush1.msra.mxu0 0.0
          %1937 = vmatprep.subr.mxu0 0.0
          %1938 = vmatpush1.msra.mxu0 0.0
          %1939 = vmatprep.mubr.f32.mxu0 0.0
          %1940 = vmatmul.mubr.f32.gmra.mrb[0].mxu0 %v1873
          %v1941 = vpop.f32.mrb[0].mxu0
          %v1942 = vadd.f32 0.0, %v1941
          %v1943 = vpop.f32.mrb[0].mxu0
          %1944 = vdwg.mxu0
          %vm1945 = vcmask 122880
          %1946 = vst.msk [vmem:[%s678] sm:$0x1] %vm1945, %v1942
        $region92: #{text_encoder_forward.1} parent=83 // pred_fallthru
          _
        %s1947 = sand.u32 %s458, 1
        %s1948 = scalar_lea.sflag [#allocation6], %s1947
        %s1949 = sand.u32 %s458, 1
        %s1950 = scalar_lea.vmem [#allocation5], %s1949
        // Predicated region
        $region93: #{text_encoder_forward.1} parent=83 // pred_check
          %p1951 = pneg %p468
        $region94: #{text_encoder_forward.1} parent=83 // pred_check_branch
          %1953 = sbr.rel (%p1951) target = $region96
        $region95: #{text_encoder_forward.1} parent=83 // pred_region
          %s1955 = ssub.s32 16, 16
          %1956 = vsyncadd %s1948, %s1955
          %s1957 = smul.addr %s41, 16
          %s1958 = scalar_lea.hbm %s17, %s1957
          %s1960 = sshll.u32 %s1950, 4
          %s1961 = int_to_ptr.vmem [resolvable:$true] %s1960
          %1963 = dma.vmem_to_hbm [thread:$0]  %s1961, 16, %s1958, %s1948
        $region96: #{text_encoder_forward.1} parent=83 // pred_fallthru
          _
      $region84: #{text_encoder_forward.1} parent=5 // pred_fallthru
        _
      %p1964 = scmp.le.s32.totalorder 2, %s32
      // Predicated region
      $region97: #{text_encoder_forward.1} parent=5 // pred_check
        %p1965 = pneg %p1964
      $region98: #{text_encoder_forward.1} parent=5 // pred_check_branch
        %1967 = sbr.rel (%p1965) target = $region100
      $region99: #{text_encoder_forward.1} parent=5 // pred_region
        %s1968 = ssub.s32 %s32, 2
        // Predicated region
        $region101: #{text_encoder_forward.1} parent=99 // pred_check
          %p1969 = pneg %p474
        $region102: #{text_encoder_forward.1} parent=99 // pred_check_branch
          %1971 = sbr.rel (%p1969) target = $region104
        $region103: #{text_encoder_forward.1} parent=99 // pred_region
          %s1972 = sand.u32 %s459, 1
          %s1973 = scalar_lea.sflag [#allocation6], %s1972
          %s1974 = sand.u32 %s459, 1
          %s1975 = scalar_lea.vmem [#allocation5], %s1974
          %1976 = dma.done %s1973, 16
        $region104: #{text_encoder_forward.1} parent=99 // pred_fallthru
          _
      $region100: #{text_encoder_forward.1} parent=5 // pred_fallthru
        _
    $region6: #{text_encoder_forward.1} parent=1 // loop_footer
      %s36 = sadd.s32 1, %s32
    $region7: #{text_encoder_forward.1} parent=1 // loop_footer_branch
      %31 = sbr.rel target = $region3
    $region8: #{text_encoder_forward.1} parent=1 // loop_exit
      _
    %1977 = vsyncpa [#allocation6], 1
    %s1978 = scalar_lea.sflag [#allocation6], 1
    %1979 = vsyncpa %s1978, 1

</llo_original>
